<compile_context>
chip_gen: v7x
topology: tpu7x:2x2x1
jax: 0.10.0
libtpu: 0.0.40
codegen_flags: <defaults>
</compile_context>

<pallas_src>
import jax
import jax.numpy as jnp
from jax.experimental import pallas as pl
from jax.experimental.pallas import tpu as pltpu

EPS = 1e-5


def resblock_kernel(x_ref, wb1_ref, bt1_ref, wb2_ref, bt2_ref, pavg_ref,
                    out_ref, pad_ref):
    # x_ref   : (1, H, W*C)        input image, lane-dense (channels fused into lanes)
    # wb*_ref : (3, W*C, W*C)      banded conv matrices (one per kh); encode kw taps + W zero-pad
    # bt*_ref : (1, W*C)           bias tiled over W
    # pavg_ref: (W*C, W*C)         per-channel pooling matrix, value 1/(H*W) where lane channels match
    # out_ref : (1, H, W*C)
    # pad_ref : (H+2, W*C) f32     H-zero-padded staging scratch (reused for both convs)
    H = out_ref.shape[1]
    WC = out_ref.shape[2]

    # Zero ONLY the two H-padding border rows, unconditionally each step.
    # (Scratch is per-core; a program_id(0)==0 gate is unsafe when the batch
    #  grid is sharded across TensorCores.  Two masked row stores are ~free.)
    zrow = jnp.zeros((1, WC), jnp.float32)
    pad_ref[pl.ds(0, 1), :] = zrow
    pad_ref[pl.ds(H + 1, 1), :] = zrow

    x = x_ref[0].astype(jnp.float32)

    def conv3x3(wb_ref, bt_ref):
        # One (H, W*C) x (W*C, W*C) MXU matmul per kh; bias folded into the first term.
        acc = jnp.dot(pad_ref[pl.ds(0, H), :], wb_ref[0],
                      preferred_element_type=jnp.float32) + bt_ref[...]
        acc = acc + jnp.dot(pad_ref[pl.ds(1, H), :], wb_ref[1],
                            preferred_element_type=jnp.float32)
        acc = acc + jnp.dot(pad_ref[pl.ds(2, H), :], wb_ref[2],
                            preferred_element_type=jnp.float32)
        return acc

    def inst_norm(y):
        # Single-pass stats: sum and sum-of-squares over H (sublane reduce), stacked into
        # a (2, W*C) slab so ONE matmul with the channel-pooling matrix both reduces over
        # W and broadcasts the per-channel mean / E[y^2] back to every (w, c) lane.
        s_row = jnp.sum(y, axis=0, keepdims=True)              # (1, W*C)
        q_row = jnp.sum(y * y, axis=0, keepdims=True)          # (1, W*C)
        sq = jnp.concatenate([s_row, q_row], axis=0)           # (2, W*C)
        pooled = jnp.dot(sq, pavg_ref[...], preferred_element_type=jnp.float32)
        mean = pooled[0:1, :]
        ex2 = pooled[1:2, :]
        var = ex2 - mean * mean                                # biased variance
        return (y - mean) * jax.lax.rsqrt(var + EPS)

    # Conv1 -> InstanceNorm -> ReLU  (stage x into the H-padded scratch interior)
    pad_ref[pl.ds(1, H), :] = x
    h1 = jnp.maximum(inst_norm(conv3x3(wb1_ref, bt1_ref)), 0.0)

    # Conv2 -> InstanceNorm  (reuse the same scratch; border rows are zero)
    pad_ref[pl.ds(1, H), :] = h1
    h2 = inst_norm(conv3x3(wb2_ref, bt2_ref))

    # Residual add
    out_ref[0] = (h2 + x).astype(out_ref.dtype)


def _banded_conv_weights(w_hwio, W):
    # w_hwio: (3, 3, Cin, Cout) -> (3, W*C, W*C).
    # banded[kh, w'*C+ci, w*C+co] = w[kh, kw, ci, co] with kw = w' - w + 1 in [0, 2];
    # taps falling outside [0, W) are dropped, which implements zero padding along W.
    C = w_hwio.shape[2]
    shift = jnp.arange(W)[None, :, None] - jnp.arange(W)[None, None, :] + 1   # (1, W, W)
    M = (shift == jnp.arange(3)[:, None, None]).astype(w_hwio.dtype)          # (3, Wsrc, Wdst)
    banded = jnp.einsum('qab,kqcd->kacbd', M, w_hwio)                         # (kh, w', ci, w, co)
    return banded.reshape(3, W * C, W * C)


@jax.jit
def res_block_pallas(x_nhwc, w1, b1, w2, b2):
    N, H, W, C = x_nhwc.shape
    WC = W * C
    x2d = x_nhwc.reshape(N, H, WC)          # free, contiguous reshape -> lane-dense slabs

    wb1 = _banded_conv_weights(w1, W)
    wb2 = _banded_conv_weights(w2, W)
    bt1 = jnp.tile(b1, W).reshape(1, WC)
    bt2 = jnp.tile(b2, W).reshape(1, WC)
    pidx = jnp.arange(WC)
    pavg = ((pidx[:, None] % C) == (pidx[None, :] % C)).astype(jnp.float32) / (H * W)

    out2d = pl.pallas_call(
        resblock_kernel,
        out_shape=jax.ShapeDtypeStruct((N, H, WC), x_nhwc.dtype),
        grid_spec=pltpu.PrefetchScalarGridSpec(
            num_scalar_prefetch=0,
            grid=(N,),
            in_specs=[
                pl.BlockSpec((1, H, WC), lambda n: (n, 0, 0)),
                pl.BlockSpec((3, WC, WC), lambda n: (0, 0, 0)),
                pl.BlockSpec((1, WC), lambda n: (0, 0)),
                pl.BlockSpec((3, WC, WC), lambda n: (0, 0, 0)),
                pl.BlockSpec((1, WC), lambda n: (0, 0)),
                pl.BlockSpec((WC, WC), lambda n: (0, 0)),
            ],
            out_specs=pl.BlockSpec((1, H, WC), lambda n: (n, 0, 0)),
            scratch_shapes=[pltpu.VMEM((H + 2, WC), jnp.float32)],
        ),
        compiler_params=pltpu.CompilerParams(
            dimension_semantics=("parallel",),       # batch grid uses both v7x TCs when N >= 2
            vmem_limit_bytes=32 * 1024 * 1024,       # explicit budget; ~1 MiB actually used here
        ),
    )(x2d, wb1, bt1, wb2, bt2, pavg)

    return out2d.reshape(N, H, W, C)


def res_block_ref(x_nhwc, w1, b1, w2, b2):
    # pure-JAX reference (matches PyTorch ResBlock semantics in NHWC)
    def conv(x, w, b):
        y = jax.lax.conv_general_dilated(
            x, w, window_strides=(1, 1), padding=((1, 1), (1, 1)),
            dimension_numbers=('NHWC', 'HWIO', 'NHWC'),
            precision=jax.lax.Precision.HIGHEST)
        return y + b[None, None, None, :]

    def inorm(y):
        m = y.mean(axis=(1, 2), keepdims=True)
        v = ((y - m) ** 2).mean(axis=(1, 2), keepdims=True)
        return (y - m) / jnp.sqrt(v + EPS)

    h = jax.nn.relu(inorm(conv(x_nhwc, w1, b1)))
    h = inorm(conv(h, w2, b2))
    return h + x_nhwc


if __name__ == "__main__":
    # small deterministic setup: batch=2, dim(channels)=8, spatial=16x16
    N, C, H, W = 2, 8, 16, 16
    key = jax.random.PRNGKey(0)
    kx, kw1, kb1, kw2, kb2 = jax.random.split(key, 5)

    # input in PyTorch NCHW convention -> transpose to NHWC for the kernel
    x_nchw = jax.random.normal(kx, (N, C, H, W), dtype=jnp.float32)
    x_nhwc = jnp.transpose(x_nchw, (0, 2, 3, 1))

    # conv params (deterministic synthetic init; shapes as nn.Conv2d(dim, dim, 3)),
    # stored directly in (kh, kw, Cin, Cout) layout
    w1 = jax.random.normal(kw1, (3, 3, C, C), dtype=jnp.float32) * 0.1
    b1 = jax.random.normal(kb1, (C,), dtype=jnp.float32) * 0.1
    w2 = jax.random.normal(kw2, (3, 3, C, C), dtype=jnp.float32) * 0.1
    b2 = jax.random.normal(kb2, (C,), dtype=jnp.float32) * 0.1

    out = jax.block_until_ready(res_block_pallas(x_nhwc, w1, b1, w2, b2))
    ref = jax.block_until_ready(res_block_ref(x_nhwc, w1, b1, w2, b2))

    assert out.shape == (N, H, W, C), out.shape
    max_err = float(jnp.max(jnp.abs(out - ref)))
    assert jnp.allclose(out, ref, rtol=5e-4, atol=5e-4), max_err

    print("KERNEL_OK")
</pallas_src>

<mosaic_0001>
module attributes {stable_mosaic.version = 11 : i64} {
  func.func @resblock_kernel(%arg0: i32, %arg1: memref<1x16x128xf32, #tpu.memory_space<vmem>>, %arg2: memref<3x128x128xf32, #tpu.memory_space<vmem>>, %arg3: memref<1x128xf32, #tpu.memory_space<vmem>>, %arg4: memref<3x128x128xf32, #tpu.memory_space<vmem>>, %arg5: memref<1x128xf32, #tpu.memory_space<vmem>>, %arg6: memref<128x128xf32, #tpu.memory_space<vmem>>, %arg7: memref<1x16x128xf32, #tpu.memory_space<vmem>>, %arg8: memref<18x128xf32, #tpu.memory_space<vmem>>) attributes {dimension_semantics = [#tpu.dimension_semantics<parallel>], iteration_bounds = array<i64: 2>, scalar_prefetch = 0 : i64, scratch_operands = 1 : i64, tpu.core_type = #tpu.core_type<tc>, window_params = [{transform_indices = @transform_0, window_bounds = array<i64: 1, 16, 128>}, {pipeline_mode = #tpu.pipeline_mode<synchronous>, transform_indices = @transform_1, window_bounds = array<i64: 3, 128, 128>}, {pipeline_mode = #tpu.pipeline_mode<synchronous>, transform_indices = @transform_2, window_bounds = array<i64: 1, 128>}, {pipeline_mode = #tpu.pipeline_mode<synchronous>, transform_indices = @transform_3, window_bounds = array<i64: 3, 128, 128>}, {pipeline_mode = #tpu.pipeline_mode<synchronous>, transform_indices = @transform_4, window_bounds = array<i64: 1, 128>}, {pipeline_mode = #tpu.pipeline_mode<synchronous>, transform_indices = @transform_5, window_bounds = array<i64: 128, 128>}, {transform_indices = @transform_6, window_bounds = array<i64: 1, 16, 128>}]} {
    %cst = arith.constant 0.000000e+00 : f32
    %0 = vector.broadcast %cst : f32 to vector<1x128xf32>
    %c0 = arith.constant 0 : index
    %c0_0 = arith.constant 0 : index
    %1 = vector.load %arg8[%c0, %c0_0] : memref<18x128xf32, #tpu.memory_space<vmem>>, vector<1x128xf32>
    tpu.vector_store %arg8[%c0, %c0_0], %0 {strides = array<i32>} : memref<18x128xf32, #tpu.memory_space<vmem>>, vector<1x128xf32>,
    %c17 = arith.constant 17 : index
    %c0_1 = arith.constant 0 : index
    %2 = vector.load %arg8[%c17, %c0_1] : memref<18x128xf32, #tpu.memory_space<vmem>>, vector<1x128xf32>
    tpu.vector_store %arg8[%c17, %c0_1], %0 {strides = array<i32>} : memref<18x128xf32, #tpu.memory_space<vmem>>, vector<1x128xf32>,
    %c0_2 = arith.constant 0 : index
    %c0_3 = arith.constant 0 : index
    %c0_4 = arith.constant 0 : index
    %3 = vector.load %arg1[%c0_2, %c0_3, %c0_4] : memref<1x16x128xf32, #tpu.memory_space<vmem>>, vector<1x16x128xf32>
    %4 = vector.shape_cast %3 : vector<1x16x128xf32> to vector<16x128xf32>
    %c1 = arith.constant 1 : index
    %c0_5 = arith.constant 0 : index
    %5 = vector.load %arg8[%c1, %c0_5] : memref<18x128xf32, #tpu.memory_space<vmem>>, vector<16x128xf32>
    tpu.vector_store %arg8[%c1, %c0_5], %4 {strides = array<i32>} : memref<18x128xf32, #tpu.memory_space<vmem>>, vector<16x128xf32>,
    %c0_6 = arith.constant 0 : index
    %c0_7 = arith.constant 0 : index
    %6 = vector.load %arg8[%c0_6, %c0_7] : memref<18x128xf32, #tpu.memory_space<vmem>>, vector<16x128xf32>
    %c0_8 = arith.constant 0 : index
    %c0_9 = arith.constant 0 : index
    %c0_10 = arith.constant 0 : index
    %7 = vector.load %arg2[%c0_8, %c0_9, %c0_10] : memref<3x128x128xf32, #tpu.memory_space<vmem>>, vector<1x128x128xf32>
    %8 = vector.shape_cast %7 : vector<1x128x128xf32> to vector<128x128xf32>
    %cst_11 = arith.constant dense<0.000000e+00> : vector<16x128xf32>
    %9 = tpu.matmul %6, %8, %cst_11 {dimension_numbers = #tpu.dot_dimension_numbers<[1], [0], [0], [1], [0, 0, 1, 1], [], []>} : vector<16x128xf32>, vector<128x128xf32>, vector<16x128xf32> -> vector<16x128xf32>
    %c0_12 = arith.constant 0 : index
    %c0_13 = arith.constant 0 : index
    %10 = vector.load %arg3[%c0_12, %c0_13] : memref<1x128xf32, #tpu.memory_space<vmem>>, vector<1x128xf32>
    %11 = vector.broadcast %10 : vector<1x128xf32> to vector<16x128xf32>
    %12 = arith.addf %9, %11 : vector<16x128xf32>
    %c1_14 = arith.constant 1 : index
    %c0_15 = arith.constant 0 : index
    %13 = vector.load %arg8[%c1_14, %c0_15] : memref<18x128xf32, #tpu.memory_space<vmem>>, vector<16x128xf32>
    %c1_16 = arith.constant 1 : index
    %c0_17 = arith.constant 0 : index
    %c0_18 = arith.constant 0 : index
    %14 = vector.load %arg2[%c1_16, %c0_17, %c0_18] : memref<3x128x128xf32, #tpu.memory_space<vmem>>, vector<1x128x128xf32>
    %15 = vector.shape_cast %14 : vector<1x128x128xf32> to vector<128x128xf32>
    %cst_19 = arith.constant dense<0.000000e+00> : vector<16x128xf32>
    %16 = tpu.matmul %13, %15, %cst_19 {dimension_numbers = #tpu.dot_dimension_numbers<[1], [0], [0], [1], [0, 0, 1, 1], [], []>} : vector<16x128xf32>, vector<128x128xf32>, vector<16x128xf32> -> vector<16x128xf32>
    %17 = arith.addf %12, %16 : vector<16x128xf32>
    %c2 = arith.constant 2 : index
    %c0_20 = arith.constant 0 : index
    %18 = vector.load %arg8[%c2, %c0_20] : memref<18x128xf32, #tpu.memory_space<vmem>>, vector<16x128xf32>
    %c2_21 = arith.constant 2 : index
    %c0_22 = arith.constant 0 : index
    %c0_23 = arith.constant 0 : index
    %19 = vector.load %arg2[%c2_21, %c0_22, %c0_23] : memref<3x128x128xf32, #tpu.memory_space<vmem>>, vector<1x128x128xf32>
    %20 = vector.shape_cast %19 : vector<1x128x128xf32> to vector<128x128xf32>
    %cst_24 = arith.constant dense<0.000000e+00> : vector<16x128xf32>
    %21 = tpu.matmul %18, %20, %cst_24 {dimension_numbers = #tpu.dot_dimension_numbers<[1], [0], [0], [1], [0, 0, 1, 1], [], []>} : vector<16x128xf32>, vector<128x128xf32>, vector<16x128xf32> -> vector<16x128xf32>
    %22 = arith.addf %17, %21 : vector<16x128xf32>
    %cst_25 = arith.constant dense<0.000000e+00> : vector<128xf32>
    %23 = vector.multi_reduction <add>, %22, %cst_25 [0] : vector<16x128xf32> to vector<128xf32>
    %24 = vector.shape_cast %23 : vector<128xf32> to vector<1x128xf32>
    %25 = arith.mulf %22, %22 : vector<16x128xf32>
    %cst_26 = arith.constant dense<0.000000e+00> : vector<128xf32>
    %26 = vector.multi_reduction <add>, %25, %cst_26 [0] : vector<16x128xf32> to vector<128xf32>
    %27 = vector.shape_cast %26 : vector<128xf32> to vector<1x128xf32>
    %28 = tpu.concatenate %24, %27 in 0 : vector<1x128xf32>, vector<1x128xf32> -> vector<2x128xf32>
    %c0_27 = arith.constant 0 : index
    %c0_28 = arith.constant 0 : index
    %29 = vector.load %arg6[%c0_27, %c0_28] : memref<128x128xf32, #tpu.memory_space<vmem>>, vector<128x128xf32>
    %cst_29 = arith.constant dense<0.000000e+00> : vector<2x128xf32>
    %30 = tpu.matmul %28, %29, %cst_29 {dimension_numbers = #tpu.dot_dimension_numbers<[1], [0], [0], [1], [0, 0, 1, 1], [], []>} : vector<2x128xf32>, vector<128x128xf32>, vector<2x128xf32> -> vector<2x128xf32>
    %31 = vector.extract_strided_slice %30 {offsets = [0, 0], sizes = [1, 128], strides = [1, 1]} : vector<2x128xf32> to vector<1x128xf32>
    %32 = vector.extract_strided_slice %30 {offsets = [1, 0], sizes = [1, 128], strides = [1, 1]} : vector<2x128xf32> to vector<1x128xf32>
    %33 = arith.mulf %31, %31 : vector<1x128xf32>
    %34 = arith.subf %32, %33 : vector<1x128xf32>
    %35 = vector.broadcast %31 : vector<1x128xf32> to vector<16x128xf32>
    %36 = arith.subf %22, %35 : vector<16x128xf32>
    %cst_30 = arith.constant 9.99999974E-6 : f32
    %37 = vector.broadcast %cst_30 : f32 to vector<1x128xf32>
    %38 = arith.addf %34, %37 : vector<1x128xf32>
    %39 = math.rsqrt %38 : vector<1x128xf32>
    %40 = vector.broadcast %39 : vector<1x128xf32> to vector<16x128xf32>
    %41 = arith.mulf %36, %40 : vector<16x128xf32>
    %cst_31 = arith.constant 0.000000e+00 : f32
    %42 = vector.broadcast %cst_31 : f32 to vector<16x128xf32>
    %43 = arith.maximumf %41, %42 : vector<16x128xf32>
    %c1_32 = arith.constant 1 : index
    %c0_33 = arith.constant 0 : index
    %44 = vector.load %arg8[%c1_32, %c0_33] : memref<18x128xf32, #tpu.memory_space<vmem>>, vector<16x128xf32>
    tpu.vector_store %arg8[%c1_32, %c0_33], %43 {strides = array<i32>} : memref<18x128xf32, #tpu.memory_space<vmem>>, vector<16x128xf32>,
    %c0_34 = arith.constant 0 : index
    %c0_35 = arith.constant 0 : index
    %45 = vector.load %arg8[%c0_34, %c0_35] : memref<18x128xf32, #tpu.memory_space<vmem>>, vector<16x128xf32>
    %c0_36 = arith.constant 0 : index
    %c0_37 = arith.constant 0 : index
    %c0_38 = arith.constant 0 : index
    %46 = vector.load %arg4[%c0_36, %c0_37, %c0_38] : memref<3x128x128xf32, #tpu.memory_space<vmem>>, vector<1x128x128xf32>
    %47 = vector.shape_cast %46 : vector<1x128x128xf32> to vector<128x128xf32>
    %cst_39 = arith.constant dense<0.000000e+00> : vector<16x128xf32>
    %48 = tpu.matmul %45, %47, %cst_39 {dimension_numbers = #tpu.dot_dimension_numbers<[1], [0], [0], [1], [0, 0, 1, 1], [], []>} : vector<16x128xf32>, vector<128x128xf32>, vector<16x128xf32> -> vector<16x128xf32>
    %c0_40 = arith.constant 0 : index
    %c0_41 = arith.constant 0 : index
    %49 = vector.load %arg5[%c0_40, %c0_41] : memref<1x128xf32, #tpu.memory_space<vmem>>, vector<1x128xf32>
    %50 = vector.broadcast %49 : vector<1x128xf32> to vector<16x128xf32>
    %51 = arith.addf %48, %50 : vector<16x128xf32>
    %c1_42 = arith.constant 1 : index
    %c0_43 = arith.constant 0 : index
    %52 = vector.load %arg8[%c1_42, %c0_43] : memref<18x128xf32, #tpu.memory_space<vmem>>, vector<16x128xf32>
    %c1_44 = arith.constant 1 : index
    %c0_45 = arith.constant 0 : index
    %c0_46 = arith.constant 0 : index
    %53 = vector.load %arg4[%c1_44, %c0_45, %c0_46] : memref<3x128x128xf32, #tpu.memory_space<vmem>>, vector<1x128x128xf32>
    %54 = vector.shape_cast %53 : vector<1x128x128xf32> to vector<128x128xf32>
    %cst_47 = arith.constant dense<0.000000e+00> : vector<16x128xf32>
    %55 = tpu.matmul %52, %54, %cst_47 {dimension_numbers = #tpu.dot_dimension_numbers<[1], [0], [0], [1], [0, 0, 1, 1], [], []>} : vector<16x128xf32>, vector<128x128xf32>, vector<16x128xf32> -> vector<16x128xf32>
    %56 = arith.addf %51, %55 : vector<16x128xf32>
    %c2_48 = arith.constant 2 : index
    %c0_49 = arith.constant 0 : index
    %57 = vector.load %arg8[%c2_48, %c0_49] : memref<18x128xf32, #tpu.memory_space<vmem>>, vector<16x128xf32>
    %c2_50 = arith.constant 2 : index
    %c0_51 = arith.constant 0 : index
    %c0_52 = arith.constant 0 : index
    %58 = vector.load %arg4[%c2_50, %c0_51, %c0_52] : memref<3x128x128xf32, #tpu.memory_space<vmem>>, vector<1x128x128xf32>
    %59 = vector.shape_cast %58 : vector<1x128x128xf32> to vector<128x128xf32>
    %cst_53 = arith.constant dense<0.000000e+00> : vector<16x128xf32>
    %60 = tpu.matmul %57, %59, %cst_53 {dimension_numbers = #tpu.dot_dimension_numbers<[1], [0], [0], [1], [0, 0, 1, 1], [], []>} : vector<16x128xf32>, vector<128x128xf32>, vector<16x128xf32> -> vector<16x128xf32>
    %61 = arith.addf %56, %60 : vector<16x128xf32>
    %cst_54 = arith.constant dense<0.000000e+00> : vector<128xf32>
    %62 = vector.multi_reduction <add>, %61, %cst_54 [0] : vector<16x128xf32> to vector<128xf32>
    %63 = vector.shape_cast %62 : vector<128xf32> to vector<1x128xf32>
    %64 = arith.mulf %61, %61 : vector<16x128xf32>
    %cst_55 = arith.constant dense<0.000000e+00> : vector<128xf32>
    %65 = vector.multi_reduction <add>, %64, %cst_55 [0] : vector<16x128xf32> to vector<128xf32>
    %66 = vector.shape_cast %65 : vector<128xf32> to vector<1x128xf32>
    %67 = tpu.concatenate %63, %66 in 0 : vector<1x128xf32>, vector<1x128xf32> -> vector<2x128xf32>
    %c0_56 = arith.constant 0 : index
    %c0_57 = arith.constant 0 : index
    %68 = vector.load %arg6[%c0_56, %c0_57] : memref<128x128xf32, #tpu.memory_space<vmem>>, vector<128x128xf32>
    %cst_58 = arith.constant dense<0.000000e+00> : vector<2x128xf32>
    %69 = tpu.matmul %67, %68, %cst_58 {dimension_numbers = #tpu.dot_dimension_numbers<[1], [0], [0], [1], [0, 0, 1, 1], [], []>} : vector<2x128xf32>, vector<128x128xf32>, vector<2x128xf32> -> vector<2x128xf32>
    %70 = vector.extract_strided_slice %69 {offsets = [0, 0], sizes = [1, 128], strides = [1, 1]} : vector<2x128xf32> to vector<1x128xf32>
    %71 = vector.extract_strided_slice %69 {offsets = [1, 0], sizes = [1, 128], strides = [1, 1]} : vector<2x128xf32> to vector<1x128xf32>
    %72 = arith.mulf %70, %70 : vector<1x128xf32>
    %73 = arith.subf %71, %72 : vector<1x128xf32>
    %74 = vector.broadcast %70 : vector<1x128xf32> to vector<16x128xf32>
    %75 = arith.subf %61, %74 : vector<16x128xf32>
    %cst_59 = arith.constant 9.99999974E-6 : f32
    %76 = vector.broadcast %cst_59 : f32 to vector<1x128xf32>
    %77 = arith.addf %73, %76 : vector<1x128xf32>
    %78 = math.rsqrt %77 : vector<1x128xf32>
    %79 = vector.broadcast %78 : vector<1x128xf32> to vector<16x128xf32>
    %80 = arith.mulf %75, %79 : vector<16x128xf32>
    %81 = arith.addf %80, %4 : vector<16x128xf32>
    %c0_60 = arith.constant 0 : index
    %c0_61 = arith.constant 0 : index
    %c0_62 = arith.constant 0 : index
    %82 = vector.load %arg7[%c0_60, %c0_61, %c0_62] : memref<1x16x128xf32, #tpu.memory_space<vmem>>, vector<1x16x128xf32>
    %83 = vector.shape_cast %82 : vector<1x16x128xf32> to vector<16x128xf32>
    %84 = vector.shape_cast %81 : vector<16x128xf32> to vector<1x16x128xf32>
    tpu.vector_store %arg7[%c0_60, %c0_61, %c0_62], %84 {strides = array<i32>} : memref<1x16x128xf32, #tpu.memory_space<vmem>>, vector<1x16x128xf32>,
    return
  }
  func.func @transform_0(%arg0: i32) -> (i32, i32, i32) {
    %c0_i32 = arith.constant 0 : i32
    %c0_i32_0 = arith.constant 0 : i32
    %c0_i32_1 = arith.constant 0 : i32
    return %arg0, %c0_i32, %c0_i32_0 : i32, i32, i32
  }
  func.func @transform_1(%arg0: i32) -> (i32, i32, i32) {
    %c0_i32 = arith.constant 0 : i32
    %c0_i32_0 = arith.constant 0 : i32
    %c0_i32_1 = arith.constant 0 : i32
    %c0_i32_2 = arith.constant 0 : i32
    return %c0_i32, %c0_i32_0, %c0_i32_1 : i32, i32, i32
  }
  func.func @transform_2(%arg0: i32) -> (i32, i32) {
    %c0_i32 = arith.constant 0 : i32
    %c0_i32_0 = arith.constant 0 : i32
    %c0_i32_1 = arith.constant 0 : i32
    return %c0_i32, %c0_i32_0 : i32, i32
  }
  func.func @transform_3(%arg0: i32) -> (i32, i32, i32) {
    %c0_i32 = arith.constant 0 : i32
    %c0_i32_0 = arith.constant 0 : i32
    %c0_i32_1 = arith.constant 0 : i32
    %c0_i32_2 = arith.constant 0 : i32
    return %c0_i32, %c0_i32_0, %c0_i32_1 : i32, i32, i32
  }
  func.func @transform_4(%arg0: i32) -> (i32, i32) {
    %c0_i32 = arith.constant 0 : i32
    %c0_i32_0 = arith.constant 0 : i32
    %c0_i32_1 = arith.constant 0 : i32
    return %c0_i32, %c0_i32_0 : i32, i32
  }
  func.func @transform_5(%arg0: i32) -> (i32, i32) {
    %c0_i32 = arith.constant 0 : i32
    %c0_i32_0 = arith.constant 0 : i32
    %c0_i32_1 = arith.constant 0 : i32
    return %c0_i32, %c0_i32_0 : i32, i32
  }
  func.func @transform_6(%arg0: i32) -> (i32, i32, i32) {
    %c0_i32 = arith.constant 0 : i32
    %c0_i32_0 = arith.constant 0 : i32
    %c0_i32_1 = arith.constant 0 : i32
    return %arg0, %c0_i32, %c0_i32_0 : i32, i32, i32
  }
}

</mosaic_0001>

<llo_original>
// kernel: tile.13
$region0: #{tile.13}
  #allocation0 [shape = 's32[1]{0}', space=sflag, size = 0x4, scoped, tag = 'scoped memory for tile.13']
  %s0 = inlined_call_operand.vmem [shape: f32[8], index: 0, kind: input, shape index: {}]
  %s1 = inlined_call_operand.vmem [shape: f32[16,8], index: 1, kind: output, shape index: {}]
  // Predicated region
  $region2: #{tile.13} parent=0 // pred_check
    _
  $region3: #{tile.13} parent=0 // pred_check_branch
    %3 = sbr.rel (0) target = $region5
  $region4: #{tile.13} parent=0 // pred_region
    _
  $region5: #{tile.13} parent=0 // pred_fallthru
    _
  %v4 = vld [vmem:[%s0] ss:$0 sm:$0xff]
  %5 = vst [vmem:[%s1] sm:$0xff] %v4
  %s6 = scalar_lea.vmem %s1, 8
  %7 = vst [vmem:[%s6] sm:$0xff] %v4

// kernel: tile.14
$region0: #{tile.14}
  %s0 = inlined_call_operand.vmem [shape: f32[16,8], index: 0, kind: input, shape index: {}]
  %s1 = inlined_call_operand.vmem [shape: f32[1,128], index: 1, kind: output, shape index: {}]
  $region1: #{tile.14} parent=0
    #allocation0 [shape = 'u8[4096]{0}', space=vmem, size = 0x1000, scoped, tag = 'scoped mem for output reshape']
    %v2 = vld [vmem:[%s0] sm:$0x1]
    %vm3 = vcmask 64512
    %4 = vst.msk [vmem:[#allocation0] sm:$0x1] %vm3, %v2
    %s5 = scalar_lea.vmem %s0, 15
    %v6 = vld [vmem:[%s5] sm:$0x1]
    %7 = vrot.lane.b32.xlu0 %v6, 120
    %v8 = vpop.permute.xlu0 %7
    %vm9 = vcmask 1048512
    %10 = vst.msk [vmem:[#allocation0] sm:$0x1] %vm9, %v8
    %s11 = scalar_lea.vmem %s0, 14
    %v12 = vld [vmem:[%s11] sm:$0x1]
    %13 = vrot.lane.b32.xlu0 %v12, 112
    %v14 = vpop.permute.xlu0 %13
    %vm15 = vcmask 982912
    %16 = vst.msk [vmem:[#allocation0] sm:$0x1] %vm15, %v14
    %s17 = scalar_lea.vmem %s0, 13
    %v18 = vld [vmem:[%s17] sm:$0x1]
    %19 = vrot.lane.b32.xlu0 %v18, 104
    %v20 = vpop.permute.xlu0 %19
    %vm21 = vcmask 917312
    %22 = vst.msk [vmem:[#allocation0] sm:$0x1] %vm21, %v20
    %s23 = scalar_lea.vmem %s0, 12
    %v24 = vld [vmem:[%s23] sm:$0x1]
    %25 = vrot.lane.b32.xlu0 %v24, 96
    %v26 = vpop.permute.xlu0 %25
    %vm27 = vcmask 851712
    %28 = vst.msk [vmem:[#allocation0] sm:$0x1] %vm27, %v26
    %s29 = scalar_lea.vmem %s0, 11
    %v30 = vld [vmem:[%s29] sm:$0x1]
    %31 = vrot.lane.b32.xlu0 %v30, 88
    %v32 = vpop.permute.xlu0 %31
    %vm33 = vcmask 786112
    %34 = vst.msk [vmem:[#allocation0] sm:$0x1] %vm33, %v32
    %s35 = scalar_lea.vmem %s0, 10
    %v36 = vld [vmem:[%s35] sm:$0x1]
    %37 = vrot.lane.b32.xlu0 %v36, 80
    %v38 = vpop.permute.xlu0 %37
    %vm39 = vcmask 720512
    %40 = vst.msk [vmem:[#allocation0] sm:$0x1] %vm39, %v38
    %s41 = scalar_lea.vmem %s0, 9
    %v42 = vld [vmem:[%s41] sm:$0x1]
    %43 = vrot.lane.b32.xlu0 %v42, 72
    %v44 = vpop.permute.xlu0 %43
    %vm45 = vcmask 654912
    %46 = vst.msk [vmem:[#allocation0] sm:$0x1] %vm45, %v44
    %s47 = scalar_lea.vmem %s0, 8
    %v48 = vld [vmem:[%s47] sm:$0x1]
    %49 = vrot.lane.b32.xlu0 %v48, 64
    %v50 = vpop.permute.xlu0 %49
    %vm51 = vcmask 589312
    %52 = vst.msk [vmem:[#allocation0] sm:$0x1] %vm51, %v50
    %s53 = scalar_lea.vmem %s0, 7
    %v54 = vld [vmem:[%s53] sm:$0x1]
    %55 = vrot.lane.b32.xlu0 %v54, 56
    %v56 = vpop.permute.xlu0 %55
    %vm57 = vcmask 523712
    %58 = vst.msk [vmem:[#allocation0] sm:$0x1] %vm57, %v56
    %s59 = scalar_lea.vmem %s0, 6
    %v60 = vld [vmem:[%s59] sm:$0x1]
    %61 = vrot.lane.b32.xlu0 %v60, 48
    %v62 = vpop.permute.xlu0 %61
    %vm63 = vcmask 458112
    %64 = vst.msk [vmem:[#allocation0] sm:$0x1] %vm63, %v62
    %s65 = scalar_lea.vmem %s0, 5
    %v66 = vld [vmem:[%s65] sm:$0x1]
    %67 = vrot.lane.b32.xlu0 %v66, 40
    %v68 = vpop.permute.xlu0 %67
    %vm69 = vcmask 392512
    %70 = vst.msk [vmem:[#allocation0] sm:$0x1] %vm69, %v68
    %s71 = scalar_lea.vmem %s0, 4
    %v72 = vld [vmem:[%s71] sm:$0x1]
    %73 = vrot.lane.b32.xlu0 %v72, 32
    %v74 = vpop.permute.xlu0 %73
    %vm75 = vcmask 326912
    %76 = vst.msk [vmem:[#allocation0] sm:$0x1] %vm75, %v74
    %s77 = scalar_lea.vmem %s0, 3
    %v78 = vld [vmem:[%s77] sm:$0x1]
    %79 = vrot.lane.b32.xlu0 %v78, 24
    %v80 = vpop.permute.xlu0 %79
    %vm81 = vcmask 261312
    %82 = vst.msk [vmem:[#allocation0] sm:$0x1] %vm81, %v80
    %s83 = scalar_lea.vmem %s0, 2
    %v84 = vld [vmem:[%s83] sm:$0x1]
    %85 = vrot.lane.b32.xlu0 %v84, 16
    %v86 = vpop.permute.xlu0 %85
    %vm87 = vcmask 195712
    %88 = vst.msk [vmem:[#allocation0] sm:$0x1] %vm87, %v86
    %s89 = scalar_lea.vmem %s0, 1
    %v90 = vld [vmem:[%s89] sm:$0x1]
    %91 = vrot.lane.b32.xlu0 %v90, 8
    %v92 = vpop.permute.xlu0 %91
    %vm93 = vcmask 130112
    %94 = vst.msk [vmem:[#allocation0] sm:$0x1] %vm93, %v92
    %s96 = sshllo.u32 0, 1
    %v98 = vld [vmem:[#allocation0] sm:%s96]
    %s99 = sshllo.u32 0, 1
    %100 = vst [vmem:[%s1] sm:%s99] %v98

// kernel: res_block_pallas.1
$region0: #{res_block_pallas.1}
  #allocation0 [shape = 'u32[]', space=smem, size = 0x4, offset = 0x4, fixed_abs, tag = 'smem constant byte address 0x4 - core index']
  #allocation1 [shape = 'u32[144,128]{1,0:T(1,128)}', space=vmem, size = 0x12000, scoped, tag = 'internal scratch']
  #allocation2 [shape = 'f32[18,128]{1,0:T(8,128)}', space=vmem, size = 0x3000, scoped, tag = 'scratch operand']
  %s0 = inlined_call_operand.vmem [shape: f32[2,16,128], index: 0, kind: input, shape index: {}]
  %s1 = inlined_call_operand.vmem [shape: f32[3,128,128], index: 1, kind: input, shape index: {}]
  %s2 = inlined_call_operand.vmem [shape: f32[1,128], index: 2, kind: input, shape index: {}]
  %s3 = inlined_call_operand.vmem [shape: f32[3,128,128], index: 3, kind: input, shape index: {}]
  %s4 = inlined_call_operand.vmem [shape: f32[1,128], index: 4, kind: input, shape index: {}]
  %s5 = inlined_call_operand.vmem [shape: f32[128,128], index: 5, kind: input, shape index: {}]
  %s6 = inlined_call_operand.vmem [shape: f32[2,16,128], index: 6, kind: output, shape index: {}]
  %s7 = sld [smem:[#allocation0]]
  $region57: #{res_block_pallas.1} parent=0
    _
  %s9 = ssub.s32 1, %s7
  %s10 = scalar_select 0, %s9, %s7
  loop: start=0, step=1, limit=4
  $region2: #{res_block_pallas.1} parent=0 // loop_pre_header
    _
  $region3: #{res_block_pallas.1} parent=0 // loop_header
    %s12 = sphi 0, %s16
    %p13 = scmp.ge.s32.totalorder %s12, 4
    %s22 = sphi 0, %s24
    %s25 = sphi 0, %s22
    %s26 = sphi 0, %s25
    %s42 = sphi 0, %s26
    %s46 = sphi 0, %s46
    %s48 = sphi 0, %s46
    %s49 = sphi 0, %s48
    %s63 = sphi 0, %s49
    %s67 = sphi 0, %s67
    %s69 = sphi 0, %s67
    %s70 = sphi 0, %s69
    %s84 = sphi 0, %s70
    %s88 = sphi 0, %s88
    %s90 = sphi 0, %s88
    %s91 = sphi 0, %s90
    %s105 = sphi 0, %s91
    %s109 = sphi 0, %s109
    %s111 = sphi 0, %s109
    %s112 = sphi 0, %s111
    %s126 = sphi 0, %s112
    %s130 = sphi 0, %s130
    %s132 = sphi 0, %s130
    %s133 = sphi 0, %s132
    %s147 = sphi 0, %s133
    %s153 = sphi 0, %s155
    %s156 = sphi 0, %s153
    %s157 = sphi 0, %s156
    %s173 = sphi 0, %s157
  $region4: #{res_block_pallas.1} parent=0 // loop_header_branch
    %15 = sbr.rel (%p13) target = $region8
  $region5: #{res_block_pallas.1} parent=0 // loop_body
    %s17 = ssub.s32 %s12, 1
    %s18 = ssub.s32 %s12, 2
    %s19 = sadd.s32 %s12, 1
    %s20 = ssub.s32 %s12, %s19
    %p21 = scmp.eq.s32.totalorder %s20, 0
    %s23 = sadd.s32 %s22, 1
    %s24 = scalar_select %p21, %s22, %s23
    %p27 = pneg %p21
    %p28 = scmp.eq.s32.totalorder %s12, 1
    %p29 = por %p27, %p28
    %p30 = scmp.ne.s32.totalorder %s22, %s25
    %p31 = scmp.eq.s32.totalorder %s12, 0
    %p32 = por %p30, %p31
    %p33 = scmp.ne.s32.totalorder %s22, %s25
    %p34 = scmp.eq.s32.totalorder %s17, 1
    %p35 = por %p33, %p34
    %p36 = scmp.ne.s32.totalorder %s25, %s26
    %p37 = scmp.eq.s32.totalorder %s17, 0
    %p38 = por %p36, %p37
    %p39 = scmp.ne.s32.totalorder %s25, %s26
    %p40 = scmp.eq.s32.totalorder %s18, 1
    %p41 = por %p39, %p40
    %p43 = scmp.ne.s32.totalorder %s26, %s42
    %p44 = scmp.eq.s32.totalorder %s18, 0
    %p45 = por %p43, %p44
    %s47 = sadd.s32 %s46, 1
    %p50 = scmp.eq.s32.totalorder %s12, 1
    %p51 = scmp.ne.s32.totalorder %s46, %s48
    %p52 = scmp.eq.s32.totalorder %s12, 0
    %p53 = por %p51, %p52
    %p54 = scmp.ne.s32.totalorder %s46, %s48
    %p55 = scmp.eq.s32.totalorder %s17, 1
    %p56 = por %p54, %p55
    %p57 = scmp.ne.s32.totalorder %s48, %s49
    %p58 = scmp.eq.s32.totalorder %s17, 0
    %p59 = por %p57, %p58
    %p60 = scmp.ne.s32.totalorder %s48, %s49
    %p61 = scmp.eq.s32.totalorder %s18, 1
    %p62 = por %p60, %p61
    %p64 = scmp.ne.s32.totalorder %s49, %s63
    %p65 = scmp.eq.s32.totalorder %s18, 0
    %p66 = por %p64, %p65
    %s68 = sadd.s32 %s67, 1
    %p71 = scmp.eq.s32.totalorder %s12, 1
    %p72 = scmp.ne.s32.totalorder %s67, %s69
    %p73 = scmp.eq.s32.totalorder %s12, 0
    %p74 = por %p72, %p73
    %p75 = scmp.ne.s32.totalorder %s67, %s69
    %p76 = scmp.eq.s32.totalorder %s17, 1
    %p77 = por %p75, %p76
    %p78 = scmp.ne.s32.totalorder %s69, %s70
    %p79 = scmp.eq.s32.totalorder %s17, 0
    %p80 = por %p78, %p79
    %p81 = scmp.ne.s32.totalorder %s69, %s70
    %p82 = scmp.eq.s32.totalorder %s18, 1
    %p83 = por %p81, %p82
    %p85 = scmp.ne.s32.totalorder %s70, %s84
    %p86 = scmp.eq.s32.totalorder %s18, 0
    %p87 = por %p85, %p86
    %s89 = sadd.s32 %s88, 1
    %p92 = scmp.eq.s32.totalorder %s12, 1
    %p93 = scmp.ne.s32.totalorder %s88, %s90
    %p94 = scmp.eq.s32.totalorder %s12, 0
    %p95 = por %p93, %p94
    %p96 = scmp.ne.s32.totalorder %s88, %s90
    %p97 = scmp.eq.s32.totalorder %s17, 1
    %p98 = por %p96, %p97
    %p99 = scmp.ne.s32.totalorder %s90, %s91
    %p100 = scmp.eq.s32.totalorder %s17, 0
    %p101 = por %p99, %p100
    %p102 = scmp.ne.s32.totalorder %s90, %s91
    %p103 = scmp.eq.s32.totalorder %s18, 1
    %p104 = por %p102, %p103
    %p106 = scmp.ne.s32.totalorder %s91, %s105
    %p107 = scmp.eq.s32.totalorder %s18, 0
    %p108 = por %p106, %p107
    %s110 = sadd.s32 %s109, 1
    %p113 = scmp.eq.s32.totalorder %s12, 1
    %p114 = scmp.ne.s32.totalorder %s109, %s111
    %p115 = scmp.eq.s32.totalorder %s12, 0
    %p116 = por %p114, %p115
    %p117 = scmp.ne.s32.totalorder %s109, %s111
    %p118 = scmp.eq.s32.totalorder %s17, 1
    %p119 = por %p117, %p118
    %p120 = scmp.ne.s32.totalorder %s111, %s112
    %p121 = scmp.eq.s32.totalorder %s17, 0
    %p122 = por %p120, %p121
    %p123 = scmp.ne.s32.totalorder %s111, %s112
    %p124 = scmp.eq.s32.totalorder %s18, 1
    %p125 = por %p123, %p124
    %p127 = scmp.ne.s32.totalorder %s112, %s126
    %p128 = scmp.eq.s32.totalorder %s18, 0
    %p129 = por %p127, %p128
    %s131 = sadd.s32 %s130, 1
    %p134 = scmp.eq.s32.totalorder %s12, 1
    %p135 = scmp.ne.s32.totalorder %s130, %s132
    %p136 = scmp.eq.s32.totalorder %s12, 0
    %p137 = por %p135, %p136
    %p138 = scmp.ne.s32.totalorder %s130, %s132
    %p139 = scmp.eq.s32.totalorder %s17, 1
    %p140 = por %p138, %p139
    %p141 = scmp.ne.s32.totalorder %s132, %s133
    %p142 = scmp.eq.s32.totalorder %s17, 0
    %p143 = por %p141, %p142
    %p144 = scmp.ne.s32.totalorder %s132, %s133
    %p145 = scmp.eq.s32.totalorder %s18, 1
    %p146 = por %p144, %p145
    %p148 = scmp.ne.s32.totalorder %s133, %s147
    %p149 = scmp.eq.s32.totalorder %s18, 0
    %p150 = por %p148, %p149
    %s151 = ssub.s32 %s12, %s19
    %p152 = scmp.eq.s32.totalorder %s151, 0
    %s154 = sadd.s32 %s153, 1
    %s155 = scalar_select %p152, %s153, %s154
    %p158 = pneg %p152
    %p159 = scmp.eq.s32.totalorder %s12, 1
    %p160 = por %p158, %p159
    %p161 = scmp.ne.s32.totalorder %s153, %s156
    %p162 = scmp.eq.s32.totalorder %s12, 0
    %p163 = por %p161, %p162
    %p164 = scmp.ne.s32.totalorder %s153, %s156
    %p165 = scmp.eq.s32.totalorder %s17, 1
    %p166 = por %p164, %p165
    %p167 = scmp.ne.s32.totalorder %s156, %s157
    %p168 = scmp.eq.s32.totalorder %s17, 0
    %p169 = por %p167, %p168
    %p170 = scmp.ne.s32.totalorder %s156, %s157
    %p171 = scmp.eq.s32.totalorder %s18, 1
    %p172 = por %p170, %p171
    %p174 = scmp.ne.s32.totalorder %s157, %s173
    %p175 = scmp.eq.s32.totalorder %s18, 0
    %p176 = por %p174, %p175
    %p177 = scmp.le.s32.totalorder 1, %s12
    %p178 = scmp.lt.s32.totalorder %s12, 3
    %p179 = pnand %p177, %p178
    %p180 = pneg %p179
    // Predicated region
    $region9: #{res_block_pallas.1} parent=5 // pred_check
      _
    $region10: #{res_block_pallas.1} parent=5 // pred_check_branch
      %182 = sbr.rel (%p179) target = $region12
    $region11: #{res_block_pallas.1} parent=5 // pred_region
      %s183 = ssub.s32 %s12, 1
      // Predicated region
      $region13: #{res_block_pallas.1} parent=11 // pred_check
        %p184 = pneg %p59
      $region14: #{res_block_pallas.1} parent=11 // pred_check_branch
        %186 = sbr.rel (%p184) target = $region16
      $region15: #{res_block_pallas.1} parent=11 // pred_region
        _
      $region16: #{res_block_pallas.1} parent=11 // pred_fallthru
        _
      // Predicated region
      $region17: #{res_block_pallas.1} parent=11 // pred_check
        %p187 = pneg %p80
      $region18: #{res_block_pallas.1} parent=11 // pred_check_branch
        %189 = sbr.rel (%p187) target = $region20
      $region19: #{res_block_pallas.1} parent=11 // pred_region
        _
      $region20: #{res_block_pallas.1} parent=11 // pred_fallthru
        _
      // Predicated region
      $region21: #{res_block_pallas.1} parent=11 // pred_check
        %p190 = pneg %p101
      $region22: #{res_block_pallas.1} parent=11 // pred_check_branch
        %192 = sbr.rel (%p190) target = $region24
      $region23: #{res_block_pallas.1} parent=11 // pred_region
        _
      $region24: #{res_block_pallas.1} parent=11 // pred_fallthru
        _
      // Predicated region
      $region25: #{res_block_pallas.1} parent=11 // pred_check
        %p193 = pneg %p122
      $region26: #{res_block_pallas.1} parent=11 // pred_check_branch
        %195 = sbr.rel (%p193) target = $region28
      $region27: #{res_block_pallas.1} parent=11 // pred_region
        _
      $region28: #{res_block_pallas.1} parent=11 // pred_fallthru
        _
      // Predicated region
      $region29: #{res_block_pallas.1} parent=11 // pred_check
        %p196 = pneg %p143
      $region30: #{res_block_pallas.1} parent=11 // pred_check_branch
        %198 = sbr.rel (%p196) target = $region32
      $region31: #{res_block_pallas.1} parent=11 // pred_region
        _
      $region32: #{res_block_pallas.1} parent=11 // pred_fallthru
        _
    $region12: #{res_block_pallas.1} parent=5 // pred_fallthru
      _
    %p199 = scmp.lt.s32.totalorder %s12, 2
    // Predicated region
    $region33: #{res_block_pallas.1} parent=5 // pred_check
      %p200 = pneg %p199
    $region34: #{res_block_pallas.1} parent=5 // pred_check_branch
      %202 = sbr.rel (%p200) target = $region36
    $region35: #{res_block_pallas.1} parent=5 // pred_region
      // Predicated region
      $region37: #{res_block_pallas.1} parent=35 // pred_check
        %p203 = pneg %p32
      $region38: #{res_block_pallas.1} parent=35 // pred_check_branch
        %205 = sbr.rel (%p203) target = $region40
      $region39: #{res_block_pallas.1} parent=35 // pred_region
        %p206 = scmp.lt.s32.totalorder %s12, 1
        %s207 = scalar_select %p206, %s12, 1
        %s208 = smul.addr %s207, 2
        %s209 = smul.addr %s208, 8
        %s210 = scalar_lea.vmem %s0, %s209
      $region40: #{res_block_pallas.1} parent=35 // pred_fallthru
        _
    $region36: #{res_block_pallas.1} parent=5 // pred_fallthru
      _
    %p211 = scmp.le.s32.totalorder 1, %s12
    %p212 = scmp.lt.s32.totalorder %s12, 3
    %p213 = pnand %p211, %p212
    %p214 = pneg %p213
    // Predicated region
    $region41: #{res_block_pallas.1} parent=5 // pred_check
      _
    $region42: #{res_block_pallas.1} parent=5 // pred_check_branch
      %216 = sbr.rel (%p213) target = $region44
    $region43: #{res_block_pallas.1} parent=5 // pred_region
      %s217 = ssub.s32 %s12, 1
      %p218 = scmp.lt.s32.totalorder %s17, 1
      %s219 = scalar_select %p218, %s17, 1
      %s220 = smul.addr %s219, 2
      %s221 = smul.addr %s220, 8
      %s222 = scalar_lea.vmem %s0, %s221
      %p223 = pneg %p38
      %p224 = pneg %p35
      %p225 = pneg %p59
      %p226 = pneg %p56
      %p227 = pneg %p80
      %p228 = pneg %p77
      %p229 = pneg %p101
      %p230 = pneg %p98
      %p231 = pneg %p122
      %p232 = pneg %p119
      %p233 = pneg %p143
      %p234 = pneg %p140
      %p235 = pneg %p169
      %p236 = pneg %p166
      %p237 = scmp.lt.s32.totalorder %s17, 1
      %s238 = scalar_select %p237, %s17, 1
      %s239 = smul.addr %s238, 2
      %s240 = smul.addr %s239, 8
      %s241 = scalar_lea.vmem %s6, %s240
      %p242 = scmp.lt.s32.totalorder %s17, 1
      %s243 = scalar_select %p242, %s17, 1
      %s244 = smul.addr %s243, 2
      %s245 = smul.addr %s244, 8
      %s246 = scalar_lea.vmem %s0, %s245
      %p247 = scmp.lt.s32.totalorder %s17, 1
      %s248 = scalar_select %p247, %s17, 1
      %s249 = smul.addr %s248, 2
      %s250 = smul.addr %s249, 8
      %s251 = scalar_lea.vmem %s6, %s250
      %252 = vst [vmem:[#allocation2] sm:$0x1] 0.0
      %253 = vst [vmem:[#allocation2 + $0x11] sm:$0x1] 0.0
      %v254 = vld [vmem:[%s246] sm:$0xff]
      %v255 = vld [vmem:[%s246 + $0x8] sm:$0xff]
      %256 = vst [vmem:[#allocation2 + $0x1] sm:$0xff] %v254
      %257 = vst [vmem:[#allocation2 + $0x9] sm:$0xff] %v255
      %v258 = vld [vmem:[#allocation2] sm:$0xff]
      %v259 = vld [vmem:[#allocation2 + $0x8] sm:$0xff]
      %v260 = vld [vmem:[%s1] sm:$0xff]
      %v261 = vld [vmem:[%s1 + $0x8] sm:$0xff]
      %v262 = vld [vmem:[%s1 + $0x10] sm:$0xff]
      %v263 = vld [vmem:[%s1 + $0x18] sm:$0xff]
      %v264 = vld [vmem:[%s1 + $0x20] sm:$0xff]
      %v265 = vld [vmem:[%s1 + $0x28] sm:$0xff]
      %v266 = vld [vmem:[%s1 + $0x30] sm:$0xff]
      %v267 = vld [vmem:[%s1 + $0x38] sm:$0xff]
      %v268 = vld [vmem:[%s1 + $0x40] sm:$0xff]
      %v269 = vld [vmem:[%s1 + $0x48] sm:$0xff]
      %v270 = vld [vmem:[%s1 + $0x50] sm:$0xff]
      %v271 = vld [vmem:[%s1 + $0x58] sm:$0xff]
      %v272 = vld [vmem:[%s1 + $0x60] sm:$0xff]
      %v273 = vld [vmem:[%s1 + $0x68] sm:$0xff]
      %v274 = vld [vmem:[%s1 + $0x70] sm:$0xff]
      %v275 = vld [vmem:[%s1 + $0x78] sm:$0xff]
      %v276 = vld [vmem:[%s2] sm:$0x1]
      %v278 = vlaneseq
      %v279 = vshrl.u32 %v278, 7
      %v280 = vsub.s32 0, %v279
      %v281 = vrot.slane %v276, %v280
      %283 = vmatprep.subr.mxu0 0.0
      %284 = vmatpush1.msra.mxu0 %v260
      %285 = vmatprep.subr.mxu0 0.0
      %286 = vmatpush1.msra.mxu0 %v261
      %287 = vmatprep.subr.mxu0 0.0
      %288 = vmatpush1.msra.mxu0 %v262
      %289 = vmatprep.subr.mxu0 0.0
      %290 = vmatpush1.msra.mxu0 %v263
      %291 = vmatprep.subr.mxu0 0.0
      %292 = vmatpush1.msra.mxu0 %v264
      %293 = vmatprep.subr.mxu0 0.0
      %294 = vmatpush1.msra.mxu0 %v265
      %295 = vmatprep.subr.mxu0 0.0
      %296 = vmatpush1.msra.mxu0 %v266
      %297 = vmatprep.subr.mxu0 0.0
      %298 = vmatpush1.msra.mxu0 %v267
      %299 = vmatprep.subr.mxu0 0.0
      %300 = vmatpush1.msra.mxu0 %v268
      %301 = vmatprep.subr.mxu0 0.0
      %302 = vmatpush1.msra.mxu0 %v269
      %303 = vmatprep.subr.mxu0 0.0
      %304 = vmatpush1.msra.mxu0 %v270
      %305 = vmatprep.subr.mxu0 0.0
      %306 = vmatpush1.msra.mxu0 %v271
      %307 = vmatprep.subr.mxu0 0.0
      %308 = vmatpush1.msra.mxu0 %v272
      %309 = vmatprep.subr.mxu0 0.0
      %310 = vmatpush1.msra.mxu0 %v273
      %311 = vmatprep.subr.mxu0 0.0
      %312 = vmatpush1.msra.mxu0 %v274
      %313 = vmatprep.subr.mxu0 0.0
      %314 = vmatpush1.msra.mxu0 %v275
      %315 = vmatprep.subr.mxu0 0.0
      %316 = vmatpush1.msra.mxu0 0.0
      %317 = vmatprep.subr.mxu0 0.0
      %318 = vmatpush1.msra.mxu0 0.0
      %319 = vmatprep.subr.mxu0 0.0
      %320 = vmatpush1.msra.mxu0 0.0
      %321 = vmatprep.subr.mxu0 0.0
      %322 = vmatpush1.msra.mxu0 0.0
      %323 = vmatprep.subr.mxu0 0.0
      %324 = vmatpush1.msra.mxu0 0.0
      %325 = vmatprep.subr.mxu0 0.0
      %326 = vmatpush1.msra.mxu0 0.0
      %327 = vmatprep.subr.mxu0 0.0
      %328 = vmatpush1.msra.mxu0 0.0
      %329 = vmatprep.subr.mxu0 0.0
      %330 = vmatpush1.msra.mxu0 0.0
      %331 = vmatprep.subr.mxu0 0.0
      %332 = vmatpush1.msra.mxu0 0.0
      %333 = vmatprep.subr.mxu0 0.0
      %334 = vmatpush1.msra.mxu0 0.0
      %335 = vmatprep.subr.mxu0 0.0
      %336 = vmatpush1.msra.mxu0 0.0
      %337 = vmatprep.subr.mxu0 0.0
      %338 = vmatpush1.msra.mxu0 0.0
      %339 = vmatprep.subr.mxu0 0.0
      %340 = vmatpush1.msra.mxu0 0.0
      %341 = vmatprep.subr.mxu0 0.0
      %342 = vmatpush1.msra.mxu0 0.0
      %343 = vmatprep.subr.mxu0 0.0
      %344 = vmatpush1.msra.mxu0 0.0
      %345 = vmatprep.subr.mxu0 0.0
      %346 = vmatpush1.msra.mxu0 0.0
      %347 = vmatprep.mubr.f32.mxu0 0.0
      %348 = vmatmul.mubr.f32.gmra.mrb[0].mxu0 %v258
      %v349 = vpop.f32.mrb[0].mxu0
      %v350 = vadd.f32 %v281, %v349
      %v351 = vpop.f32.mrb[0].mxu0
      %352 = vmatprep.mubr.f32.mxu0 0.0
      %353 = vmatmul.mubr.f32.gmra.mrb[0].mxu0 %v259
      %v354 = vpop.f32.mrb[0].mxu0
      %v355 = vadd.f32 %v281, %v354
      %v356 = vpop.f32.mrb[0].mxu0
      %357 = vdwg.mxu0
      %v358 = vld [vmem:[#allocation2 + $0x1] sm:$0xff]
      %v359 = vld [vmem:[#allocation2 + $0x9] sm:$0xff]
      %s360 = scalar_lea.vmem %s1, 128
      %v361 = vld [vmem:[%s360] sm:$0xff]
      %v362 = vld [vmem:[%s360 + $0x8] sm:$0xff]
      %v363 = vld [vmem:[%s360 + $0x10] sm:$0xff]
      %v364 = vld [vmem:[%s360 + $0x18] sm:$0xff]
      %v365 = vld [vmem:[%s360 + $0x20] sm:$0xff]
      %v366 = vld [vmem:[%s360 + $0x28] sm:$0xff]
      %v367 = vld [vmem:[%s360 + $0x30] sm:$0xff]
      %v368 = vld [vmem:[%s360 + $0x38] sm:$0xff]
      %v369 = vld [vmem:[%s360 + $0x40] sm:$0xff]
      %v370 = vld [vmem:[%s360 + $0x48] sm:$0xff]
      %v371 = vld [vmem:[%s360 + $0x50] sm:$0xff]
      %v372 = vld [vmem:[%s360 + $0x58] sm:$0xff]
      %v373 = vld [vmem:[%s360 + $0x60] sm:$0xff]
      %v374 = vld [vmem:[%s360 + $0x68] sm:$0xff]
      %v375 = vld [vmem:[%s360 + $0x70] sm:$0xff]
      %v376 = vld [vmem:[%s360 + $0x78] sm:$0xff]
      %377 = vmatprep.subr.mxu0 0.0
      %378 = vmatpush1.msra.mxu0 %v361
      %379 = vmatprep.subr.mxu0 0.0
      %380 = vmatpush1.msra.mxu0 %v362
      %381 = vmatprep.subr.mxu0 0.0
      %382 = vmatpush1.msra.mxu0 %v363
      %383 = vmatprep.subr.mxu0 0.0
      %384 = vmatpush1.msra.mxu0 %v364
      %385 = vmatprep.subr.mxu0 0.0
      %386 = vmatpush1.msra.mxu0 %v365
      %387 = vmatprep.subr.mxu0 0.0
      %388 = vmatpush1.msra.mxu0 %v366
      %389 = vmatprep.subr.mxu0 0.0
      %390 = vmatpush1.msra.mxu0 %v367
      %391 = vmatprep.subr.mxu0 0.0
      %392 = vmatpush1.msra.mxu0 %v368
      %393 = vmatprep.subr.mxu0 0.0
      %394 = vmatpush1.msra.mxu0 %v369
      %395 = vmatprep.subr.mxu0 0.0
      %396 = vmatpush1.msra.mxu0 %v370
      %397 = vmatprep.subr.mxu0 0.0
      %398 = vmatpush1.msra.mxu0 %v371
      %399 = vmatprep.subr.mxu0 0.0
      %400 = vmatpush1.msra.mxu0 %v372
      %401 = vmatprep.subr.mxu0 0.0
      %402 = vmatpush1.msra.mxu0 %v373
      %403 = vmatprep.subr.mxu0 0.0
      %404 = vmatpush1.msra.mxu0 %v374
      %405 = vmatprep.subr.mxu0 0.0
      %406 = vmatpush1.msra.mxu0 %v375
      %407 = vmatprep.subr.mxu0 0.0
      %408 = vmatpush1.msra.mxu0 %v376
      %409 = vmatprep.subr.mxu0 0.0
      %410 = vmatpush1.msra.mxu0 0.0
      %411 = vmatprep.subr.mxu0 0.0
      %412 = vmatpush1.msra.mxu0 0.0
      %413 = vmatprep.subr.mxu0 0.0
      %414 = vmatpush1.msra.mxu0 0.0
      %415 = vmatprep.subr.mxu0 0.0
      %416 = vmatpush1.msra.mxu0 0.0
      %417 = vmatprep.subr.mxu0 0.0
      %418 = vmatpush1.msra.mxu0 0.0
      %419 = vmatprep.subr.mxu0 0.0
      %420 = vmatpush1.msra.mxu0 0.0
      %421 = vmatprep.subr.mxu0 0.0
      %422 = vmatpush1.msra.mxu0 0.0
      %423 = vmatprep.subr.mxu0 0.0
      %424 = vmatpush1.msra.mxu0 0.0
      %425 = vmatprep.subr.mxu0 0.0
      %426 = vmatpush1.msra.mxu0 0.0
      %427 = vmatprep.subr.mxu0 0.0
      %428 = vmatpush1.msra.mxu0 0.0
      %429 = vmatprep.subr.mxu0 0.0
      %430 = vmatpush1.msra.mxu0 0.0
      %431 = vmatprep.subr.mxu0 0.0
      %432 = vmatpush1.msra.mxu0 0.0
      %433 = vmatprep.subr.mxu0 0.0
      %434 = vmatpush1.msra.mxu0 0.0
      %435 = vmatprep.subr.mxu0 0.0
      %436 = vmatpush1.msra.mxu0 0.0
      %437 = vmatprep.subr.mxu0 0.0
      %438 = vmatpush1.msra.mxu0 0.0
      %439 = vmatprep.subr.mxu0 0.0
      %440 = vmatpush1.msra.mxu0 0.0
      %441 = vmatprep.mubr.f32.mxu0 0.0
      %442 = vmatmul.mubr.f32.gmra.mrb[0].mxu0 %v358
      %v443 = vpop.f32.mrb[0].mxu0
      %v444 = vadd.f32 0.0, %v443
      %v445 = vpop.f32.mrb[0].mxu0
      %446 = vmatprep.mubr.f32.mxu0 0.0
      %447 = vmatmul.mubr.f32.gmra.mrb[0].mxu0 %v359
      %v448 = vpop.f32.mrb[0].mxu0
      %v449 = vadd.f32 0.0, %v448
      %v450 = vpop.f32.mrb[0].mxu0
      %451 = vdwg.mxu0
      %v452 = vadd.f32 %v350, %v444
      %v453 = vadd.f32 %v355, %v449
      %v454 = vld [vmem:[#allocation2 + $0x2] sm:$0xff]
      %v455 = vld [vmem:[#allocation2 + $0xa] sm:$0xff]
      %s456 = scalar_lea.vmem %s1, 256
      %v457 = vld [vmem:[%s456] sm:$0xff]
      %v458 = vld [vmem:[%s456 + $0x8] sm:$0xff]
      %v459 = vld [vmem:[%s456 + $0x10] sm:$0xff]
      %v460 = vld [vmem:[%s456 + $0x18] sm:$0xff]
      %v461 = vld [vmem:[%s456 + $0x20] sm:$0xff]
      %v462 = vld [vmem:[%s456 + $0x28] sm:$0xff]
      %v463 = vld [vmem:[%s456 + $0x30] sm:$0xff]
      %v464 = vld [vmem:[%s456 + $0x38] sm:$0xff]
      %v465 = vld [vmem:[%s456 + $0x40] sm:$0xff]
      %v466 = vld [vmem:[%s456 + $0x48] sm:$0xff]
      %v467 = vld [vmem:[%s456 + $0x50] sm:$0xff]
      %v468 = vld [vmem:[%s456 + $0x58] sm:$0xff]
      %v469 = vld [vmem:[%s456 + $0x60] sm:$0xff]
      %v470 = vld [vmem:[%s456 + $0x68] sm:$0xff]
      %v471 = vld [vmem:[%s456 + $0x70] sm:$0xff]
      %v472 = vld [vmem:[%s456 + $0x78] sm:$0xff]
      %473 = vmatprep.subr.mxu0 0.0
      %474 = vmatpush1.msra.mxu0 %v457
      %475 = vmatprep.subr.mxu0 0.0
      %476 = vmatpush1.msra.mxu0 %v458
      %477 = vmatprep.subr.mxu0 0.0
      %478 = vmatpush1.msra.mxu0 %v459
      %479 = vmatprep.subr.mxu0 0.0
      %480 = vmatpush1.msra.mxu0 %v460
      %481 = vmatprep.subr.mxu0 0.0
      %482 = vmatpush1.msra.mxu0 %v461
      %483 = vmatprep.subr.mxu0 0.0
      %484 = vmatpush1.msra.mxu0 %v462
      %485 = vmatprep.subr.mxu0 0.0
      %486 = vmatpush1.msra.mxu0 %v463
      %487 = vmatprep.subr.mxu0 0.0
      %488 = vmatpush1.msra.mxu0 %v464
      %489 = vmatprep.subr.mxu0 0.0
      %490 = vmatpush1.msra.mxu0 %v465
      %491 = vmatprep.subr.mxu0 0.0
      %492 = vmatpush1.msra.mxu0 %v466
      %493 = vmatprep.subr.mxu0 0.0
      %494 = vmatpush1.msra.mxu0 %v467
      %495 = vmatprep.subr.mxu0 0.0
      %496 = vmatpush1.msra.mxu0 %v468
      %497 = vmatprep.subr.mxu0 0.0
      %498 = vmatpush1.msra.mxu0 %v469
      %499 = vmatprep.subr.mxu0 0.0
      %500 = vmatpush1.msra.mxu0 %v470
      %501 = vmatprep.subr.mxu0 0.0
      %502 = vmatpush1.msra.mxu0 %v471
      %503 = vmatprep.subr.mxu0 0.0
      %504 = vmatpush1.msra.mxu0 %v472
      %505 = vmatprep.subr.mxu0 0.0
      %506 = vmatpush1.msra.mxu0 0.0
      %507 = vmatprep.subr.mxu0 0.0
      %508 = vmatpush1.msra.mxu0 0.0
      %509 = vmatprep.subr.mxu0 0.0
      %510 = vmatpush1.msra.mxu0 0.0
      %511 = vmatprep.subr.mxu0 0.0
      %512 = vmatpush1.msra.mxu0 0.0
      %513 = vmatprep.subr.mxu0 0.0
      %514 = vmatpush1.msra.mxu0 0.0
      %515 = vmatprep.subr.mxu0 0.0
      %516 = vmatpush1.msra.mxu0 0.0
      %517 = vmatprep.subr.mxu0 0.0
      %518 = vmatpush1.msra.mxu0 0.0
      %519 = vmatprep.subr.mxu0 0.0
      %520 = vmatpush1.msra.mxu0 0.0
      %521 = vmatprep.subr.mxu0 0.0
      %522 = vmatpush1.msra.mxu0 0.0
      %523 = vmatprep.subr.mxu0 0.0
      %524 = vmatpush1.msra.mxu0 0.0
      %525 = vmatprep.subr.mxu0 0.0
      %526 = vmatpush1.msra.mxu0 0.0
      %527 = vmatprep.subr.mxu0 0.0
      %528 = vmatpush1.msra.mxu0 0.0
      %529 = vmatprep.subr.mxu0 0.0
      %530 = vmatpush1.msra.mxu0 0.0
      %531 = vmatprep.subr.mxu0 0.0
      %532 = vmatpush1.msra.mxu0 0.0
      %533 = vmatprep.subr.mxu0 0.0
      %534 = vmatpush1.msra.mxu0 0.0
      %535 = vmatprep.subr.mxu0 0.0
      %536 = vmatpush1.msra.mxu0 0.0
      %537 = vmatprep.mubr.f32.mxu0 0.0
      %538 = vmatmul.mubr.f32.gmra.mrb[0].mxu0 %v454
      %v539 = vpop.f32.mrb[0].mxu0
      %v540 = vadd.f32 0.0, %v539
      %v541 = vpop.f32.mrb[0].mxu0
      %542 = vmatprep.mubr.f32.mxu0 0.0
      %543 = vmatmul.mubr.f32.gmra.mrb[0].mxu0 %v455
      %v544 = vpop.f32.mrb[0].mxu0
      %v545 = vadd.f32 0.0, %v544
      %v546 = vpop.f32.mrb[0].mxu0
      %547 = vdwg.mxu0
      %v548 = vadd.f32 %v452, %v540
      %v549 = vadd.f32 %v453, %v545
      %v550 = vadd.f32 %v548, %v549
      %v551 = vrot.slane %v550, 4
      %v552 = vadd.f32 %v550, %v551
      %v553 = vrot.slane %v552, 2
      %v554 = vadd.f32 %v552, %v553
      %v555 = vrot.slane %v554, 1
      %v556 = vadd.f32 %v554, %v555
      %v557 = vmul.f32 %v548, %v548
      %v558 = vmul.f32 %v549, %v549
      %v559 = vadd.f32 %v557, %v558
      %v560 = vrot.slane %v559, 4
      %v561 = vadd.f32 %v559, %v560
      %v562 = vrot.slane %v561, 2
      %v563 = vadd.f32 %v561, %v562
      %v564 = vrot.slane %v563, 1
      %v565 = vadd.f32 %v563, %v564
      %vm566 = vcmask 1040384
      %v567 = vsel %vm566, %v556, %v565
      %v568 = vld [vmem:[%s5] sm:$0xff]
      %v569 = vld [vmem:[%s5 + $0x8] sm:$0xff]
      %v570 = vld [vmem:[%s5 + $0x10] sm:$0xff]
      %v571 = vld [vmem:[%s5 + $0x18] sm:$0xff]
      %v572 = vld [vmem:[%s5 + $0x20] sm:$0xff]
      %v573 = vld [vmem:[%s5 + $0x28] sm:$0xff]
      %v574 = vld [vmem:[%s5 + $0x30] sm:$0xff]
      %v575 = vld [vmem:[%s5 + $0x38] sm:$0xff]
      %v576 = vld [vmem:[%s5 + $0x40] sm:$0xff]
      %v577 = vld [vmem:[%s5 + $0x48] sm:$0xff]
      %v578 = vld [vmem:[%s5 + $0x50] sm:$0xff]
      %v579 = vld [vmem:[%s5 + $0x58] sm:$0xff]
      %v580 = vld [vmem:[%s5 + $0x60] sm:$0xff]
      %v581 = vld [vmem:[%s5 + $0x68] sm:$0xff]
      %v582 = vld [vmem:[%s5 + $0x70] sm:$0xff]
      %v583 = vld [vmem:[%s5 + $0x78] sm:$0xff]
      %584 = vmatprep.subr.mxu0 0.0
      %585 = vmatpush1.msra.mxu0 %v568
      %586 = vmatprep.subr.mxu0 0.0
      %587 = vmatpush1.msra.mxu0 %v569
      %588 = vmatprep.subr.mxu0 0.0
      %589 = vmatpush1.msra.mxu0 %v570
      %590 = vmatprep.subr.mxu0 0.0
      %591 = vmatpush1.msra.mxu0 %v571
      %592 = vmatprep.subr.mxu0 0.0
      %593 = vmatpush1.msra.mxu0 %v572
      %594 = vmatprep.subr.mxu0 0.0
      %595 = vmatpush1.msra.mxu0 %v573
      %596 = vmatprep.subr.mxu0 0.0
      %597 = vmatpush1.msra.mxu0 %v574
      %598 = vmatprep.subr.mxu0 0.0
      %599 = vmatpush1.msra.mxu0 %v575
      %600 = vmatprep.subr.mxu0 0.0
      %601 = vmatpush1.msra.mxu0 %v576
      %602 = vmatprep.subr.mxu0 0.0
      %603 = vmatpush1.msra.mxu0 %v577
      %604 = vmatprep.subr.mxu0 0.0
      %605 = vmatpush1.msra.mxu0 %v578
      %606 = vmatprep.subr.mxu0 0.0
      %607 = vmatpush1.msra.mxu0 %v579
      %608 = vmatprep.subr.mxu0 0.0
      %609 = vmatpush1.msra.mxu0 %v580
      %610 = vmatprep.subr.mxu0 0.0
      %611 = vmatpush1.msra.mxu0 %v581
      %612 = vmatprep.subr.mxu0 0.0
      %613 = vmatpush1.msra.mxu0 %v582
      %614 = vmatprep.subr.mxu0 0.0
      %615 = vmatpush1.msra.mxu0 %v583
      %616 = vmatprep.subr.mxu0 0.0
      %617 = vmatpush1.msra.mxu0 0.0
      %618 = vmatprep.subr.mxu0 0.0
      %619 = vmatpush1.msra.mxu0 0.0
      %620 = vmatprep.subr.mxu0 0.0
      %621 = vmatpush1.msra.mxu0 0.0
      %622 = vmatprep.subr.mxu0 0.0
      %623 = vmatpush1.msra.mxu0 0.0
      %624 = vmatprep.subr.mxu0 0.0
      %625 = vmatpush1.msra.mxu0 0.0
      %626 = vmatprep.subr.mxu0 0.0
      %627 = vmatpush1.msra.mxu0 0.0
      %628 = vmatprep.subr.mxu0 0.0
      %629 = vmatpush1.msra.mxu0 0.0
      %630 = vmatprep.subr.mxu0 0.0
      %631 = vmatpush1.msra.mxu0 0.0
      %632 = vmatprep.subr.mxu0 0.0
      %633 = vmatpush1.msra.mxu0 0.0
      %634 = vmatprep.subr.mxu0 0.0
      %635 = vmatpush1.msra.mxu0 0.0
      %636 = vmatprep.subr.mxu0 0.0
      %637 = vmatpush1.msra.mxu0 0.0
      %638 = vmatprep.subr.mxu0 0.0
      %639 = vmatpush1.msra.mxu0 0.0
      %640 = vmatprep.subr.mxu0 0.0
      %641 = vmatpush1.msra.mxu0 0.0
      %642 = vmatprep.subr.mxu0 0.0
      %643 = vmatpush1.msra.mxu0 0.0
      %644 = vmatprep.subr.mxu0 0.0
      %645 = vmatpush1.msra.mxu0 0.0
      %646 = vmatprep.subr.mxu0 0.0
      %647 = vmatpush1.msra.mxu0 0.0
      %648 = vmatprep.mubr.f32.mxu0 0.0
      %649 = vmatmul.mubr.f32.gmra.mrb[0].mxu0 %v567
      %v650 = vpop.f32.mrb[0].mxu0
      %v651 = vadd.f32 0.0, %v650
      %v652 = vpop.f32.mrb[0].mxu0
      %653 = vdwg.mxu0
      %v654 = vmul.f32 %v651, %v651
      %v656 = vrot.slane %v654, 7
      %v658 = vsub.f32 %v651, %v656
      %v659 = vlaneseq
      %v660 = vshrl.u32 %v659, 7
      %v661 = vsub.s32 0, %v660
      %v662 = vrot.slane %v651, %v661
      %v663 = vsub.f32 %v548, %v662
      %v664 = vsub.f32 %v549, %v662
      %v665 = vadd.f32 %v658, 1e-05
      %v666 = vrsqrt.pop %v665
      %v667 = vlaneseq
      %v668 = vshrl.u32 %v667, 7
      %v669 = vsub.s32 1, %v668
      %v670 = vrot.slane %v666, %v669
      %v671 = vmul.f32 %v663, %v670
      %v672 = vmul.f32 %v664, %v670
      %v673 = vmax.f32 %v671, 0.0
      %v674 = vmax.f32 %v672, 0.0
      %675 = vst [vmem:[#allocation2 + $0x1] sm:$0xff] %v673
      %676 = vst [vmem:[#allocation2 + $0x9] sm:$0xff] %v674
      %v677 = vld [vmem:[#allocation2] sm:$0xff]
      %v678 = vld [vmem:[#allocation2 + $0x8] sm:$0xff]
      %v679 = vld [vmem:[%s3] sm:$0xff]
      %v680 = vld [vmem:[%s3 + $0x8] sm:$0xff]
      %v681 = vld [vmem:[%s3 + $0x10] sm:$0xff]
      %v682 = vld [vmem:[%s3 + $0x18] sm:$0xff]
      %v683 = vld [vmem:[%s3 + $0x20] sm:$0xff]
      %v684 = vld [vmem:[%s3 + $0x28] sm:$0xff]
      %v685 = vld [vmem:[%s3 + $0x30] sm:$0xff]
      %v686 = vld [vmem:[%s3 + $0x38] sm:$0xff]
      %v687 = vld [vmem:[%s3 + $0x40] sm:$0xff]
      %v688 = vld [vmem:[%s3 + $0x48] sm:$0xff]
      %v689 = vld [vmem:[%s3 + $0x50] sm:$0xff]
      %v690 = vld [vmem:[%s3 + $0x58] sm:$0xff]
      %v691 = vld [vmem:[%s3 + $0x60] sm:$0xff]
      %v692 = vld [vmem:[%s3 + $0x68] sm:$0xff]
      %v693 = vld [vmem:[%s3 + $0x70] sm:$0xff]
      %v694 = vld [vmem:[%s3 + $0x78] sm:$0xff]
      %v695 = vld [vmem:[%s4] sm:$0x1]
      %v697 = vlaneseq
      %v698 = vshrl.u32 %v697, 7
      %v699 = vsub.s32 0, %v698
      %v700 = vrot.slane %v695, %v699
      %702 = vmatprep.subr.mxu0 0.0
      %703 = vmatpush1.msra.mxu0 %v679
      %704 = vmatprep.subr.mxu0 0.0
      %705 = vmatpush1.msra.mxu0 %v680
      %706 = vmatprep.subr.mxu0 0.0
      %707 = vmatpush1.msra.mxu0 %v681
      %708 = vmatprep.subr.mxu0 0.0
      %709 = vmatpush1.msra.mxu0 %v682
      %710 = vmatprep.subr.mxu0 0.0
      %711 = vmatpush1.msra.mxu0 %v683
      %712 = vmatprep.subr.mxu0 0.0
      %713 = vmatpush1.msra.mxu0 %v684
      %714 = vmatprep.subr.mxu0 0.0
      %715 = vmatpush1.msra.mxu0 %v685
      %716 = vmatprep.subr.mxu0 0.0
      %717 = vmatpush1.msra.mxu0 %v686
      %718 = vmatprep.subr.mxu0 0.0
      %719 = vmatpush1.msra.mxu0 %v687
      %720 = vmatprep.subr.mxu0 0.0
      %721 = vmatpush1.msra.mxu0 %v688
      %722 = vmatprep.subr.mxu0 0.0
      %723 = vmatpush1.msra.mxu0 %v689
      %724 = vmatprep.subr.mxu0 0.0
      %725 = vmatpush1.msra.mxu0 %v690
      %726 = vmatprep.subr.mxu0 0.0
      %727 = vmatpush1.msra.mxu0 %v691
      %728 = vmatprep.subr.mxu0 0.0
      %729 = vmatpush1.msra.mxu0 %v692
      %730 = vmatprep.subr.mxu0 0.0
      %731 = vmatpush1.msra.mxu0 %v693
      %732 = vmatprep.subr.mxu0 0.0
      %733 = vmatpush1.msra.mxu0 %v694
      %734 = vmatprep.subr.mxu0 0.0
      %735 = vmatpush1.msra.mxu0 0.0
      %736 = vmatprep.subr.mxu0 0.0
      %737 = vmatpush1.msra.mxu0 0.0
      %738 = vmatprep.subr.mxu0 0.0
      %739 = vmatpush1.msra.mxu0 0.0
      %740 = vmatprep.subr.mxu0 0.0
      %741 = vmatpush1.msra.mxu0 0.0
      %742 = vmatprep.subr.mxu0 0.0
      %743 = vmatpush1.msra.mxu0 0.0
      %744 = vmatprep.subr.mxu0 0.0
      %745 = vmatpush1.msra.mxu0 0.0
      %746 = vmatprep.subr.mxu0 0.0
      %747 = vmatpush1.msra.mxu0 0.0
      %748 = vmatprep.subr.mxu0 0.0
      %749 = vmatpush1.msra.mxu0 0.0
      %750 = vmatprep.subr.mxu0 0.0
      %751 = vmatpush1.msra.mxu0 0.0
      %752 = vmatprep.subr.mxu0 0.0
      %753 = vmatpush1.msra.mxu0 0.0
      %754 = vmatprep.subr.mxu0 0.0
      %755 = vmatpush1.msra.mxu0 0.0
      %756 = vmatprep.subr.mxu0 0.0
      %757 = vmatpush1.msra.mxu0 0.0
      %758 = vmatprep.subr.mxu0 0.0
      %759 = vmatpush1.msra.mxu0 0.0
      %760 = vmatprep.subr.mxu0 0.0
      %761 = vmatpush1.msra.mxu0 0.0
      %762 = vmatprep.subr.mxu0 0.0
      %763 = vmatpush1.msra.mxu0 0.0
      %764 = vmatprep.subr.mxu0 0.0
      %765 = vmatpush1.msra.mxu0 0.0
      %766 = vmatprep.mubr.f32.mxu0 0.0
      %767 = vmatmul.mubr.f32.gmra.mrb[0].mxu0 %v677
      %v768 = vpop.f32.mrb[0].mxu0
      %v769 = vadd.f32 %v700, %v768
      %v770 = vpop.f32.mrb[0].mxu0
      %771 = vmatprep.mubr.f32.mxu0 0.0
      %772 = vmatmul.mubr.f32.gmra.mrb[0].mxu0 %v678
      %v773 = vpop.f32.mrb[0].mxu0
      %v774 = vadd.f32 %v700, %v773
      %v775 = vpop.f32.mrb[0].mxu0
      %776 = vdwg.mxu0
      %v777 = vld [vmem:[#allocation2 + $0x1] sm:$0xff]
      %v778 = vld [vmem:[#allocation2 + $0x9] sm:$0xff]
      %s779 = scalar_lea.vmem %s3, 128
      %v780 = vld [vmem:[%s779] sm:$0xff]
      %v781 = vld [vmem:[%s779 + $0x8] sm:$0xff]
      %v782 = vld [vmem:[%s779 + $0x10] sm:$0xff]
      %v783 = vld [vmem:[%s779 + $0x18] sm:$0xff]
      %v784 = vld [vmem:[%s779 + $0x20] sm:$0xff]
      %v785 = vld [vmem:[%s779 + $0x28] sm:$0xff]
      %v786 = vld [vmem:[%s779 + $0x30] sm:$0xff]
      %v787 = vld [vmem:[%s779 + $0x38] sm:$0xff]
      %v788 = vld [vmem:[%s779 + $0x40] sm:$0xff]
      %v789 = vld [vmem:[%s779 + $0x48] sm:$0xff]
      %v790 = vld [vmem:[%s779 + $0x50] sm:$0xff]
      %v791 = vld [vmem:[%s779 + $0x58] sm:$0xff]
      %v792 = vld [vmem:[%s779 + $0x60] sm:$0xff]
      %v793 = vld [vmem:[%s779 + $0x68] sm:$0xff]
      %v794 = vld [vmem:[%s779 + $0x70] sm:$0xff]
      %v795 = vld [vmem:[%s779 + $0x78] sm:$0xff]
      %796 = vmatprep.subr.mxu0 0.0
      %797 = vmatpush1.msra.mxu0 %v780
      %798 = vmatprep.subr.mxu0 0.0
      %799 = vmatpush1.msra.mxu0 %v781
      %800 = vmatprep.subr.mxu0 0.0
      %801 = vmatpush1.msra.mxu0 %v782
      %802 = vmatprep.subr.mxu0 0.0
      %803 = vmatpush1.msra.mxu0 %v783
      %804 = vmatprep.subr.mxu0 0.0
      %805 = vmatpush1.msra.mxu0 %v784
      %806 = vmatprep.subr.mxu0 0.0
      %807 = vmatpush1.msra.mxu0 %v785
      %808 = vmatprep.subr.mxu0 0.0
      %809 = vmatpush1.msra.mxu0 %v786
      %810 = vmatprep.subr.mxu0 0.0
      %811 = vmatpush1.msra.mxu0 %v787
      %812 = vmatprep.subr.mxu0 0.0
      %813 = vmatpush1.msra.mxu0 %v788
      %814 = vmatprep.subr.mxu0 0.0
      %815 = vmatpush1.msra.mxu0 %v789
      %816 = vmatprep.subr.mxu0 0.0
      %817 = vmatpush1.msra.mxu0 %v790
      %818 = vmatprep.subr.mxu0 0.0
      %819 = vmatpush1.msra.mxu0 %v791
      %820 = vmatprep.subr.mxu0 0.0
      %821 = vmatpush1.msra.mxu0 %v792
      %822 = vmatprep.subr.mxu0 0.0
      %823 = vmatpush1.msra.mxu0 %v793
      %824 = vmatprep.subr.mxu0 0.0
      %825 = vmatpush1.msra.mxu0 %v794
      %826 = vmatprep.subr.mxu0 0.0
      %827 = vmatpush1.msra.mxu0 %v795
      %828 = vmatprep.subr.mxu0 0.0
      %829 = vmatpush1.msra.mxu0 0.0
      %830 = vmatprep.subr.mxu0 0.0
      %831 = vmatpush1.msra.mxu0 0.0
      %832 = vmatprep.subr.mxu0 0.0
      %833 = vmatpush1.msra.mxu0 0.0
      %834 = vmatprep.subr.mxu0 0.0
      %835 = vmatpush1.msra.mxu0 0.0
      %836 = vmatprep.subr.mxu0 0.0
      %837 = vmatpush1.msra.mxu0 0.0
      %838 = vmatprep.subr.mxu0 0.0
      %839 = vmatpush1.msra.mxu0 0.0
      %840 = vmatprep.subr.mxu0 0.0
      %841 = vmatpush1.msra.mxu0 0.0
      %842 = vmatprep.subr.mxu0 0.0
      %843 = vmatpush1.msra.mxu0 0.0
      %844 = vmatprep.subr.mxu0 0.0
      %845 = vmatpush1.msra.mxu0 0.0
      %846 = vmatprep.subr.mxu0 0.0
      %847 = vmatpush1.msra.mxu0 0.0
      %848 = vmatprep.subr.mxu0 0.0
      %849 = vmatpush1.msra.mxu0 0.0
      %850 = vmatprep.subr.mxu0 0.0
      %851 = vmatpush1.msra.mxu0 0.0
      %852 = vmatprep.subr.mxu0 0.0
      %853 = vmatpush1.msra.mxu0 0.0
      %854 = vmatprep.subr.mxu0 0.0
      %855 = vmatpush1.msra.mxu0 0.0
      %856 = vmatprep.subr.mxu0 0.0
      %857 = vmatpush1.msra.mxu0 0.0
      %858 = vmatprep.subr.mxu0 0.0
      %859 = vmatpush1.msra.mxu0 0.0
      %860 = vmatprep.mubr.f32.mxu0 0.0
      %861 = vmatmul.mubr.f32.gmra.mrb[0].mxu0 %v777
      %v862 = vpop.f32.mrb[0].mxu0
      %v863 = vadd.f32 0.0, %v862
      %v864 = vpop.f32.mrb[0].mxu0
      %865 = vmatprep.mubr.f32.mxu0 0.0
      %866 = vmatmul.mubr.f32.gmra.mrb[0].mxu0 %v778
      %v867 = vpop.f32.mrb[0].mxu0
      %v868 = vadd.f32 0.0, %v867
      %v869 = vpop.f32.mrb[0].mxu0
      %870 = vdwg.mxu0
      %v871 = vadd.f32 %v769, %v863
      %v872 = vadd.f32 %v774, %v868
      %v873 = vld [vmem:[#allocation2 + $0x2] sm:$0xff]
      %v874 = vld [vmem:[#allocation2 + $0xa] sm:$0xff]
      %s875 = scalar_lea.vmem %s3, 256
      %v876 = vld [vmem:[%s875] sm:$0xff]
      %v877 = vld [vmem:[%s875 + $0x8] sm:$0xff]
      %v878 = vld [vmem:[%s875 + $0x10] sm:$0xff]
      %v879 = vld [vmem:[%s875 + $0x18] sm:$0xff]
      %v880 = vld [vmem:[%s875 + $0x20] sm:$0xff]
      %v881 = vld [vmem:[%s875 + $0x28] sm:$0xff]
      %v882 = vld [vmem:[%s875 + $0x30] sm:$0xff]
      %v883 = vld [vmem:[%s875 + $0x38] sm:$0xff]
      %v884 = vld [vmem:[%s875 + $0x40] sm:$0xff]
      %v885 = vld [vmem:[%s875 + $0x48] sm:$0xff]
      %v886 = vld [vmem:[%s875 + $0x50] sm:$0xff]
      %v887 = vld [vmem:[%s875 + $0x58] sm:$0xff]
      %v888 = vld [vmem:[%s875 + $0x60] sm:$0xff]
      %v889 = vld [vmem:[%s875 + $0x68] sm:$0xff]
      %v890 = vld [vmem:[%s875 + $0x70] sm:$0xff]
      %v891 = vld [vmem:[%s875 + $0x78] sm:$0xff]
      %892 = vmatprep.subr.mxu0 0.0
      %893 = vmatpush1.msra.mxu0 %v876
      %894 = vmatprep.subr.mxu0 0.0
      %895 = vmatpush1.msra.mxu0 %v877
      %896 = vmatprep.subr.mxu0 0.0
      %897 = vmatpush1.msra.mxu0 %v878
      %898 = vmatprep.subr.mxu0 0.0
      %899 = vmatpush1.msra.mxu0 %v879
      %900 = vmatprep.subr.mxu0 0.0
      %901 = vmatpush1.msra.mxu0 %v880
      %902 = vmatprep.subr.mxu0 0.0
      %903 = vmatpush1.msra.mxu0 %v881
      %904 = vmatprep.subr.mxu0 0.0
      %905 = vmatpush1.msra.mxu0 %v882
      %906 = vmatprep.subr.mxu0 0.0
      %907 = vmatpush1.msra.mxu0 %v883
      %908 = vmatprep.subr.mxu0 0.0
      %909 = vmatpush1.msra.mxu0 %v884
      %910 = vmatprep.subr.mxu0 0.0
      %911 = vmatpush1.msra.mxu0 %v885
      %912 = vmatprep.subr.mxu0 0.0
      %913 = vmatpush1.msra.mxu0 %v886
      %914 = vmatprep.subr.mxu0 0.0
      %915 = vmatpush1.msra.mxu0 %v887
      %916 = vmatprep.subr.mxu0 0.0
      %917 = vmatpush1.msra.mxu0 %v888
      %918 = vmatprep.subr.mxu0 0.0
      %919 = vmatpush1.msra.mxu0 %v889
      %920 = vmatprep.subr.mxu0 0.0
      %921 = vmatpush1.msra.mxu0 %v890
      %922 = vmatprep.subr.mxu0 0.0
      %923 = vmatpush1.msra.mxu0 %v891
      %924 = vmatprep.subr.mxu0 0.0
      %925 = vmatpush1.msra.mxu0 0.0
      %926 = vmatprep.subr.mxu0 0.0
      %927 = vmatpush1.msra.mxu0 0.0
      %928 = vmatprep.subr.mxu0 0.0
      %929 = vmatpush1.msra.mxu0 0.0
      %930 = vmatprep.subr.mxu0 0.0
      %931 = vmatpush1.msra.mxu0 0.0
      %932 = vmatprep.subr.mxu0 0.0
      %933 = vmatpush1.msra.mxu0 0.0
      %934 = vmatprep.subr.mxu0 0.0
      %935 = vmatpush1.msra.mxu0 0.0
      %936 = vmatprep.subr.mxu0 0.0
      %937 = vmatpush1.msra.mxu0 0.0
      %938 = vmatprep.subr.mxu0 0.0
      %939 = vmatpush1.msra.mxu0 0.0
      %940 = vmatprep.subr.mxu0 0.0
      %941 = vmatpush1.msra.mxu0 0.0
      %942 = vmatprep.subr.mxu0 0.0
      %943 = vmatpush1.msra.mxu0 0.0
      %944 = vmatprep.subr.mxu0 0.0
      %945 = vmatpush1.msra.mxu0 0.0
      %946 = vmatprep.subr.mxu0 0.0
      %947 = vmatpush1.msra.mxu0 0.0
      %948 = vmatprep.subr.mxu0 0.0
      %949 = vmatpush1.msra.mxu0 0.0
      %950 = vmatprep.subr.mxu0 0.0
      %951 = vmatpush1.msra.mxu0 0.0
      %952 = vmatprep.subr.mxu0 0.0
      %953 = vmatpush1.msra.mxu0 0.0
      %954 = vmatprep.subr.mxu0 0.0
      %955 = vmatpush1.msra.mxu0 0.0
      %956 = vmatprep.mubr.f32.mxu0 0.0
      %957 = vmatmul.mubr.f32.gmra.mrb[0].mxu0 %v873
      %v958 = vpop.f32.mrb[0].mxu0
      %v959 = vadd.f32 0.0, %v958
      %v960 = vpop.f32.mrb[0].mxu0
      %961 = vmatprep.mubr.f32.mxu0 0.0
      %962 = vmatmul.mubr.f32.gmra.mrb[0].mxu0 %v874
      %v963 = vpop.f32.mrb[0].mxu0
      %v964 = vadd.f32 0.0, %v963
      %v965 = vpop.f32.mrb[0].mxu0
      %966 = vdwg.mxu0
      %v967 = vadd.f32 %v871, %v959
      %v968 = vadd.f32 %v872, %v964
      %v969 = vadd.f32 %v967, %v968
      %v970 = vrot.slane %v969, 4
      %v971 = vadd.f32 %v969, %v970
      %v972 = vrot.slane %v971, 2
      %v973 = vadd.f32 %v971, %v972
      %v974 = vrot.slane %v973, 1
      %v975 = vadd.f32 %v973, %v974
      %v976 = vmul.f32 %v967, %v967
      %v977 = vmul.f32 %v968, %v968
      %v978 = vadd.f32 %v976, %v977
      %v979 = vrot.slane %v978, 4
      %v980 = vadd.f32 %v978, %v979
      %v981 = vrot.slane %v980, 2
      %v982 = vadd.f32 %v980, %v981
      %v983 = vrot.slane %v982, 1
      %v984 = vadd.f32 %v982, %v983
      %v985 = vsel %vm566, %v975, %v984
      %v986 = vld [vmem:[%s5] sm:$0xff]
      %v987 = vld [vmem:[%s5 + $0x8] sm:$0xff]
      %v988 = vld [vmem:[%s5 + $0x10] sm:$0xff]
      %v989 = vld [vmem:[%s5 + $0x18] sm:$0xff]
      %v990 = vld [vmem:[%s5 + $0x20] sm:$0xff]
      %v991 = vld [vmem:[%s5 + $0x28] sm:$0xff]
      %v992 = vld [vmem:[%s5 + $0x30] sm:$0xff]
      %v993 = vld [vmem:[%s5 + $0x38] sm:$0xff]
      %v994 = vld [vmem:[%s5 + $0x40] sm:$0xff]
      %v995 = vld [vmem:[%s5 + $0x48] sm:$0xff]
      %v996 = vld [vmem:[%s5 + $0x50] sm:$0xff]
      %v997 = vld [vmem:[%s5 + $0x58] sm:$0xff]
      %v998 = vld [vmem:[%s5 + $0x60] sm:$0xff]
      %v999 = vld [vmem:[%s5 + $0x68] sm:$0xff]
      %v1000 = vld [vmem:[%s5 + $0x70] sm:$0xff]
      %v1001 = vld [vmem:[%s5 + $0x78] sm:$0xff]
      %1002 = vmatprep.subr.mxu0 0.0
      %1003 = vmatpush1.msra.mxu0 %v986
      %1004 = vmatprep.subr.mxu0 0.0
      %1005 = vmatpush1.msra.mxu0 %v987
      %1006 = vmatprep.subr.mxu0 0.0
      %1007 = vmatpush1.msra.mxu0 %v988
      %1008 = vmatprep.subr.mxu0 0.0
      %1009 = vmatpush1.msra.mxu0 %v989
      %1010 = vmatprep.subr.mxu0 0.0
      %1011 = vmatpush1.msra.mxu0 %v990
      %1012 = vmatprep.subr.mxu0 0.0
      %1013 = vmatpush1.msra.mxu0 %v991
      %1014 = vmatprep.subr.mxu0 0.0
      %1015 = vmatpush1.msra.mxu0 %v992
      %1016 = vmatprep.subr.mxu0 0.0
      %1017 = vmatpush1.msra.mxu0 %v993
      %1018 = vmatprep.subr.mxu0 0.0
      %1019 = vmatpush1.msra.mxu0 %v994
      %1020 = vmatprep.subr.mxu0 0.0
      %1021 = vmatpush1.msra.mxu0 %v995
      %1022 = vmatprep.subr.mxu0 0.0
      %1023 = vmatpush1.msra.mxu0 %v996
      %1024 = vmatprep.subr.mxu0 0.0
      %1025 = vmatpush1.msra.mxu0 %v997
      %1026 = vmatprep.subr.mxu0 0.0
      %1027 = vmatpush1.msra.mxu0 %v998
      %1028 = vmatprep.subr.mxu0 0.0
      %1029 = vmatpush1.msra.mxu0 %v999
      %1030 = vmatprep.subr.mxu0 0.0
      %1031 = vmatpush1.msra.mxu0 %v1000
      %1032 = vmatprep.subr.mxu0 0.0
      %1033 = vmatpush1.msra.mxu0 %v1001
      %1034 = vmatprep.subr.mxu0 0.0
      %1035 = vmatpush1.msra.mxu0 0.0
      %1036 = vmatprep.subr.mxu0 0.0
      %1037 = vmatpush1.msra.mxu0 0.0
      %1038 = vmatprep.subr.mxu0 0.0
      %1039 = vmatpush1.msra.mxu0 0.0
      %1040 = vmatprep.subr.mxu0 0.0
      %1041 = vmatpush1.msra.mxu0 0.0
      %1042 = vmatprep.subr.mxu0 0.0
      %1043 = vmatpush1.msra.mxu0 0.0
      %1044 = vmatprep.subr.mxu0 0.0
      %1045 = vmatpush1.msra.mxu0 0.0
      %1046 = vmatprep.subr.mxu0 0.0
      %1047 = vmatpush1.msra.mxu0 0.0
      %1048 = vmatprep.subr.mxu0 0.0
      %1049 = vmatpush1.msra.mxu0 0.0
      %1050 = vmatprep.subr.mxu0 0.0
      %1051 = vmatpush1.msra.mxu0 0.0
      %1052 = vmatprep.subr.mxu0 0.0
      %1053 = vmatpush1.msra.mxu0 0.0
      %1054 = vmatprep.subr.mxu0 0.0
      %1055 = vmatpush1.msra.mxu0 0.0
      %1056 = vmatprep.subr.mxu0 0.0
      %1057 = vmatpush1.msra.mxu0 0.0
      %1058 = vmatprep.subr.mxu0 0.0
      %1059 = vmatpush1.msra.mxu0 0.0
      %1060 = vmatprep.subr.mxu0 0.0
      %1061 = vmatpush1.msra.mxu0 0.0
      %1062 = vmatprep.subr.mxu0 0.0
      %1063 = vmatpush1.msra.mxu0 0.0
      %1064 = vmatprep.subr.mxu0 0.0
      %1065 = vmatpush1.msra.mxu0 0.0
      %1066 = vmatprep.mubr.f32.mxu0 0.0
      %1067 = vmatmul.mubr.f32.gmra.mrb[0].mxu0 %v985
      %v1068 = vpop.f32.mrb[0].mxu0
      %v1069 = vadd.f32 0.0, %v1068
      %v1070 = vpop.f32.mrb[0].mxu0
      %1071 = vdwg.mxu0
      %v1072 = vmul.f32 %v1069, %v1069
      %v1074 = vrot.slane %v1072, 7
      %v1076 = vsub.f32 %v1069, %v1074
      %v1077 = vlaneseq
      %v1078 = vshrl.u32 %v1077, 7
      %v1079 = vsub.s32 0, %v1078
      %v1080 = vrot.slane %v1069, %v1079
      %v1081 = vsub.f32 %v967, %v1080
      %v1082 = vsub.f32 %v968, %v1080
      %v1083 = vadd.f32 %v1076, 1e-05
      %v1084 = vrsqrt.pop %v1083
      %v1085 = vlaneseq
      %v1086 = vshrl.u32 %v1085, 7
      %v1087 = vsub.s32 1, %v1086
      %v1088 = vrot.slane %v1084, %v1087
      %v1089 = vmul.f32 %v1081, %v1088
      %v1090 = vmul.f32 %v1082, %v1088
      %v1091 = vadd.f32 %v1089, %v254
      %v1092 = vadd.f32 %v1090, %v255
      %1093 = vst [vmem:[%s251] sm:$0xff] %v1091
      %1094 = vst [vmem:[%s251 + $0x8] sm:$0xff] %v1092
      %p1095 = scmp.lt.s32.totalorder %s17, 1
      %s1096 = scalar_select %p1095, %s17, 1
      %s1097 = smul.addr %s1096, 2
      %s1098 = smul.addr %s1097, 8
      %s1099 = scalar_lea.vmem %s6, %s1098
      // Predicated region
      $region45: #{res_block_pallas.1} parent=43 // pred_check
        %p1100 = pneg %p166
      $region46: #{res_block_pallas.1} parent=43 // pred_check_branch
        %1102 = sbr.rel (%p1100) target = $region48
      $region47: #{res_block_pallas.1} parent=43 // pred_region
        _
      $region48: #{res_block_pallas.1} parent=43 // pred_fallthru
        _
    $region44: #{res_block_pallas.1} parent=5 // pred_fallthru
      _
    %p1103 = scmp.le.s32.totalorder 2, %s12
    // Predicated region
    $region49: #{res_block_pallas.1} parent=5 // pred_check
      %p1104 = pneg %p1103
    $region50: #{res_block_pallas.1} parent=5 // pred_check_branch
      %1106 = sbr.rel (%p1104) target = $region52
    $region51: #{res_block_pallas.1} parent=5 // pred_region
      %s1107 = ssub.s32 %s12, 2
      // Predicated region
      $region53: #{res_block_pallas.1} parent=51 // pred_check
        %p1108 = pneg %p172
      $region54: #{res_block_pallas.1} parent=51 // pred_check_branch
        %1110 = sbr.rel (%p1108) target = $region56
      $region55: #{res_block_pallas.1} parent=51 // pred_region
        %p1111 = scmp.lt.s32.totalorder %s18, 1
        %s1112 = scalar_select %p1111, %s18, 1
        %s1113 = smul.addr %s1112, 2
        %s1114 = smul.addr %s1113, 8
        %s1115 = scalar_lea.vmem %s6, %s1114
      $region56: #{res_block_pallas.1} parent=51 // pred_fallthru
        _
    $region52: #{res_block_pallas.1} parent=5 // pred_fallthru
      _
  $region6: #{res_block_pallas.1} parent=0 // loop_footer
    %s16 = sadd.s32 1, %s12
  $region7: #{res_block_pallas.1} parent=0 // loop_footer_branch
    %11 = sbr.rel target = $region3
  $region8: #{res_block_pallas.1} parent=0 // loop_exit
    _

</llo_original>
